<compile_context>
chip_gen: v7x
topology: tpu7x:2x2x1
jax: 0.10.0
libtpu: 0.0.40
codegen_flags: <defaults>
</compile_context>

<pallas_src>
import functools

import jax
import jax.numpy as jnp
from jax import lax
from jax.experimental import pallas as pl
from jax.experimental.pallas import tpu as pltpu


# ----------------------- conv1: matmul + bias + LeakyReLU ---------------------

def _mm_bias_act_kernel(x_ref, w_ref, b_ref, o_ref, *, negative_slope):
    """Fused matmul + bias + LeakyReLU.  f32 accumulate, cast on store."""
    acc = jnp.dot(x_ref[...], w_ref[...], preferred_element_type=jnp.float32)
    acc = acc + b_ref[...]
    if negative_slope is not None:
        acc = jnp.maximum(acc, negative_slope * acc)
    o_ref[...] = acc.astype(o_ref.dtype)


def matmul_bias_act(x, w, b, *, negative_slope=None, out_dtype=jnp.float32,
                    tile_m=4096):
    """x: (M, K), w: (K, N), b: (N,) -> (M, N) in out_dtype.

    Emitting bf16 directly halves the HBM write of the conv1 activation and
    removes the follow-up XLA cast pass (conv1 is purely HBM-bound).  M is
    tiled with a large tile (4096) and marked "parallel" for megacore.
    """
    M, K = x.shape
    Kw, N = w.shape
    assert K == Kw
    tm = M if M <= tile_m else tile_m
    # (8,128) block constraint: tm must be 8-row aligned unless it spans all of M.
    assert tm == M or tm % 8 == 0, (M, tm)
    kernel = functools.partial(_mm_bias_act_kernel,
                               negative_slope=negative_slope)
    cost = pl.CostEstimate(
        flops=2 * M * N * K,
        transcendentals=0,
        bytes_accessed=(x.size * x.dtype.itemsize
                        + w.size * w.dtype.itemsize
                        + N * 4
                        + M * N * jnp.dtype(out_dtype).itemsize),
    )
    return pl.pallas_call(
        kernel,
        out_shape=jax.ShapeDtypeStruct((M, N), out_dtype),
        grid=(pl.cdiv(M, tm),),
        in_specs=[
            pl.BlockSpec((tm, K), lambda i: (i, 0)),
            pl.BlockSpec((K, N), lambda i: (0, 0)),
            pl.BlockSpec((1, N), lambda i: (0, 0)),
        ],
        out_specs=pl.BlockSpec((tm, N), lambda i: (i, 0)),
        compiler_params=pltpu.CompilerParams(
            dimension_semantics=("parallel",)),
        cost_estimate=cost,
    )(x, w, b.reshape(1, N))


# ------- conv2 + InstanceNorm + LeakyReLU + Linear + Sigmoid (per batch) ------

def _conv2_in_lin_kernel(x_ref, w_ref, b_ref, wl_ref, bl_ref, o_ref, y2_ref,
                         *, H2, W2, eps, negative_slope):
    """Per-batch fused kernel.

    x_ref : (1, 2*H2+2, W2+1, 128) bf16  padded y1; adjacent W pixels folded
            into the lane dim (2 pixels x 64 channels).
    w_ref : (8, 128, 128) bf16  conv2 weight; index = kh*2 + kw//2,
            rows = (kw%2)*64 + cin, cols = cout.
    b_ref : (1, 128)  f32 conv2 bias.
    wl_ref: (H2, W2, 128) f32 final Linear weight in NHWC spatial order.
    bl_ref: (1, 1)    f32 final Linear bias.
    o_ref : (1, 1, 1) f32 per-batch sigmoid probability.
    y2_ref: (H2, W2, 128) f32 VMEM scratch holding conv2 + bias output.
    """
    inv_s = 1.0 / (H2 * W2)

    # -- Pass 1: conv2 as shifted matmuls (no materialized im2col), row by
    #    row so the live f32 accumulator is only (W2, 128); store each row in
    #    VMEM scratch and accumulate per-channel sums for the mean.
    def pass1(oh, ch_sum):
        acc = jnp.zeros((W2, 128), jnp.float32)
        for kh in range(4):                              # unrolled static taps
            row = x_ref[0, 2 * oh + kh, :, :]            # (W2+1, 128) bf16
            # kw in {0,1}: input pixels (2*ow, 2*ow+1)   -> pair index ow
            acc += jnp.dot(row[:W2, :], w_ref[2 * kh, :, :],
                           preferred_element_type=jnp.float32)
            # kw in {2,3}: input pixels (2*ow+2, 2*ow+3) -> pair index ow+1
            acc += jnp.dot(row[1:, :], w_ref[2 * kh + 1, :, :],
                           preferred_element_type=jnp.float32)
        acc = acc + b_ref[...]
        y2_ref[oh, :, :] = acc
        return ch_sum + jnp.sum(acc, axis=0, keepdims=True)

    ch_sum = lax.fori_loop(0, H2, pass1, jnp.zeros((1, 128), jnp.float32))
    mean = ch_sum * inv_s

    # -- Pass 2: two-pass variance (subtract mean, then square) — numerically
    #    safer than E[x^2] - E[x]^2.  Biased (divide by S), matching
    #    nn.InstanceNorm2d.
    def pass2(oh, ch_var):
        d = y2_ref[oh, :, :] - mean
        return ch_var + jnp.sum(d * d, axis=0, keepdims=True)

    ch_var = lax.fori_loop(0, H2, pass2, jnp.zeros((1, 128), jnp.float32))
    inv_std = lax.rsqrt(ch_var * inv_s + eps)

    # -- Pass 3: normalize + LeakyReLU(0.2) + Linear partial (VPU mul + XLU
    #    reduce; never an N=1 MXU matmul).
    def pass3(oh, part):
        y = (y2_ref[oh, :, :] - mean) * inv_std
        y = jnp.maximum(y, negative_slope * y)
        return part + jnp.sum(y * wl_ref[oh, :, :], axis=0, keepdims=True)

    part = lax.fori_loop(0, H2, pass3, jnp.zeros((1, 128), jnp.float32))

    # -- Final 128-lane reduce + Linear bias + sigmoid, folded in-kernel.
    logit = jnp.sum(part, axis=1, keepdims=True) + bl_ref[...]       # (1, 1)
    o_ref[...] = jax.nn.sigmoid(logit).reshape(1, 1, 1)


def conv2_in_lrelu_linear(x2, w2, b2, wl, bl, *, H2, W2):
    """x2: (B, 2*H2+2, W2+1, 128) bf16, w2: (8,128,128), b2: (128,),
    wl: (H2, W2, 128) f32, bl: (1, 1) f32  ->  (B, 1, 1) f32 probabilities."""
    B, Hp, Wc, C = x2.shape
    assert Wc == W2 + 1 and C == 128 and Hp == 2 * H2 + 2
    S = H2 * W2
    kernel = functools.partial(_conv2_in_lin_kernel, H2=H2, W2=W2,
                               eps=1e-5, negative_slope=0.2)
    cost = pl.CostEstimate(
        flops=2 * B * S * 128 * (16 * 64) + 12 * B * S * 128,
        transcendentals=B * (128 + 1),
        bytes_accessed=(x2.size * x2.dtype.itemsize
                        + w2.size * w2.dtype.itemsize
                        + wl.size * 4 + 128 * 4 + 4 + B * 4),
    )
    return pl.pallas_call(
        kernel,
        out_shape=jax.ShapeDtypeStruct((B, 1, 1), jnp.float32),
        grid=(B,),
        in_specs=[
            pl.BlockSpec((1, Hp, Wc, C), lambda bi: (bi, 0, 0, 0)),
            pl.BlockSpec((8, 128, 128), lambda bi: (0, 0, 0)),
            pl.BlockSpec((1, 128), lambda bi: (0, 0)),
            pl.BlockSpec((H2, W2, 128), lambda bi: (0, 0, 0)),
            pl.BlockSpec((1, 1), lambda bi: (0, 0)),
        ],
        out_specs=pl.BlockSpec((1, 1, 1), lambda bi: (bi, 0, 0)),
        scratch_shapes=[pltpu.VMEM((H2, W2, 128), jnp.float32)],
        compiler_params=pltpu.CompilerParams(
            dimension_semantics=("parallel",)),
        cost_estimate=cost,
    )(x2, w2, b2.reshape(1, 128), wl, bl)


# --------------------------------- JAX glue -----------------------------------

def im2col(x, K=4, S=2, P=1):
    """x: (B, H, W, C) NHWC -> (B*Ho*Wo, K*K*C) patches in (kh, kw, cin) order.

    Only used for conv1 (C=2, K*K*C=32) where the inflation is negligible.
    """
    B, H, W, C = x.shape
    xp = jnp.pad(x, ((0, 0), (P, P), (P, P), (0, 0)))
    Ho = (H + 2 * P - K) // S + 1
    Wo = (W + 2 * P - K) // S + 1
    cols = []
    for kh in range(K):
        for kw in range(K):
            cols.append(xp[:, kh:kh + S * Ho:S, kw:kw + S * Wo:S, :])
    patches = jnp.stack(cols, axis=3)              # (B, Ho, Wo, K*K, C)
    return patches.reshape(B * Ho * Wo, K * K * C), Ho, Wo


def init_params(key, image_size):
    """Deterministic synthetic parameters with the module's shapes."""
    ks = jax.random.split(key, 6)
    feat = 128 * (image_size // 4) * (image_size // 4)
    return dict(
        w1=jax.random.normal(ks[0], (64, 2, 4, 4), jnp.float32) * 0.05,
        b1=jax.random.normal(ks[1], (64,), jnp.float32) * 0.05,
        w2=jax.random.normal(ks[2], (128, 64, 4, 4), jnp.float32) * 0.02,
        b2=jax.random.normal(ks[3], (128,), jnp.float32) * 0.02,
        w_lin=jax.random.normal(ks[4], (1, feat), jnp.float32) * 0.01,
        b_lin=jax.random.normal(ks[5], (1,), jnp.float32) * 0.01,
    )


def discriminator_forward(params, real_imgs, fake_imgs, use_bf16=True):
    """real_imgs, fake_imgs: (B, 1, H, W) NCHW (torch convention) -> (B, 1)."""
    mm_dtype = jnp.bfloat16 if use_bf16 else jnp.float32

    x = jnp.concatenate([real_imgs, fake_imgs], axis=1)   # (B, 2, H, W)
    x = jnp.transpose(x, (0, 2, 3, 1))                    # NHWC
    B = x.shape[0]

    # Conv2d(2, 64, k=4, s=2, p=1) + LeakyReLU(0.2): im2col + fused matmul,
    # bf16 emitted straight from the kernel (f32 accumulate inside).
    p1, H1, W1 = im2col(x)                                 # (B*H1*W1, 32)
    w1m = jnp.transpose(params["w1"], (2, 3, 1, 0)).reshape(4 * 4 * 2, 64)
    y1 = matmul_bias_act(p1.astype(mm_dtype), w1m.astype(mm_dtype),
                         params["b1"], negative_slope=0.2, out_dtype=mm_dtype)
    y1 = y1.reshape(B, H1, W1, 64)

    # Conv2d(64, 128) + InstanceNorm2d + LeakyReLU + Linear + Sigmoid, fully
    # fused per batch element.  No materialized im2col for conv2: pad y1 and
    # fold adjacent W pixels into the lane dim so every conv tap is a
    # contiguous (W2, 128) x (128, 128) matmul inside the kernel.
    H2, W2 = H1 // 2, W1 // 2
    x2 = jnp.pad(y1, ((0, 0), (1, 1), (1, 1), (0, 0)))     # (B, H1+2, W1+2, 64)
    x2 = x2.reshape(B, H1 + 2, (W1 + 2) // 2, 128)         # pair W pixels -> 128 lanes

    # (cout, cin, kh, kw) -> (kh, kw, cin, cout) -> [kh*2 + kw//2, (kw%2)*64+cin, cout]
    w2m = jnp.transpose(params["w2"], (2, 3, 1, 0)).reshape(4, 2, 128, 128)
    w2m = w2m.reshape(8, 128, 128)

    # Torch flattens NCHW (idx = c*S + h*W2 + w); permute the Linear weight to
    # the kernel's NHWC (H2, W2, C) order instead of permuting activations.
    wl = params["w_lin"].reshape(128, H2, W2).transpose(1, 2, 0)
    bl = params["b_lin"].reshape(1, 1)

    probs = conv2_in_lrelu_linear(x2, w2m.astype(mm_dtype), params["b2"],
                                  wl, bl, H2=H2, W2=W2)    # (B, 1, 1)
    return probs.reshape(B, 1)


# ----------------------------------- main --------------------------------------

if __name__ == "__main__":
    image_size = 16   # small, divisible by 4 (module default is 128)
    batch = 2

    key = jax.random.PRNGKey(0)
    k_param, k_real, k_fake = jax.random.split(key, 3)
    params = init_params(k_param, image_size)
    real = jax.random.normal(k_real, (batch, 1, image_size, image_size), jnp.float32)
    fake = jax.random.normal(k_fake, (batch, 1, image_size, image_size), jnp.float32)

    fwd = jax.jit(functools.partial(discriminator_forward, params))
    out = fwd(real, fake)
    jax.block_until_ready(out)

    assert out.shape == (batch, 1)
    assert bool(jnp.all(jnp.isfinite(out)))
    assert bool(jnp.all((out >= 0.0) & (out <= 1.0)))
    print("KERNEL_OK")
</pallas_src>

<mosaic_0001>
module attributes {stable_mosaic.version = 11 : i64} {
  func.func @_mm_bias_act_kernel(%arg0: i32, %arg1: memref<128x32xbf16, #tpu.memory_space<vmem>>, %arg2: memref<32x64xbf16, #tpu.memory_space<vmem>>, %arg3: memref<1x64xf32, #tpu.memory_space<vmem>>, %arg4: memref<128x64xbf16, #tpu.memory_space<vmem>>) attributes {dimension_semantics = [#tpu.dimension_semantics<parallel>], iteration_bounds = array<i64: 1>, scalar_prefetch = 0 : i64, scratch_operands = 0 : i64, tpu.core_type = #tpu.core_type<tc>, window_params = [{transform_indices = @transform_0, window_bounds = array<i64: 128, 32>}, {pipeline_mode = #tpu.pipeline_mode<synchronous>, transform_indices = @transform_1, window_bounds = array<i64: 32, 64>}, {pipeline_mode = #tpu.pipeline_mode<synchronous>, transform_indices = @transform_2, window_bounds = array<i64: 1, 64>}, {transform_indices = @transform_3, window_bounds = array<i64: 128, 64>}]} {
    %c0 = arith.constant 0 : index
    %c0_0 = arith.constant 0 : index
    %0 = vector.load %arg1[%c0, %c0_0] : memref<128x32xbf16, #tpu.memory_space<vmem>>, vector<128x32xbf16>
    %c0_1 = arith.constant 0 : index
    %c0_2 = arith.constant 0 : index
    %1 = vector.load %arg2[%c0_1, %c0_2] : memref<32x64xbf16, #tpu.memory_space<vmem>>, vector<32x64xbf16>
    %cst = arith.constant dense<0.000000e+00> : vector<128x64xf32>
    %2 = tpu.matmul %0, %1, %cst {dimension_numbers = #tpu.dot_dimension_numbers<[1], [0], [0], [1], [0, 0, 1, 1], [], []>} : vector<128x32xbf16>, vector<32x64xbf16>, vector<128x64xf32> -> vector<128x64xf32>
    %c0_3 = arith.constant 0 : index
    %c0_4 = arith.constant 0 : index
    %3 = vector.load %arg3[%c0_3, %c0_4] : memref<1x64xf32, #tpu.memory_space<vmem>>, vector<1x64xf32>
    %4 = vector.broadcast %3 : vector<1x64xf32> to vector<128x64xf32>
    %5 = arith.addf %2, %4 : vector<128x64xf32>
    %cst_5 = arith.constant 2.000000e-01 : f32
    %6 = vector.broadcast %cst_5 : f32 to vector<128x64xf32>
    %7 = arith.mulf %6, %5 : vector<128x64xf32>
    %8 = arith.maximumf %5, %7 : vector<128x64xf32>
    %9 = arith.truncf %8 : vector<128x64xf32> to vector<128x64xbf16>
    %c0_6 = arith.constant 0 : index
    %c0_7 = arith.constant 0 : index
    %10 = vector.load %arg4[%c0_6, %c0_7] : memref<128x64xbf16, #tpu.memory_space<vmem>>, vector<128x64xbf16>
    tpu.vector_store %arg4[%c0_6, %c0_7], %9 {strides = array<i32>} : memref<128x64xbf16, #tpu.memory_space<vmem>>, vector<128x64xbf16>,
    return
  }
  func.func @transform_0(%arg0: i32) -> (i32, i32) {
    %c0_i32 = arith.constant 0 : i32
    %c0_i32_0 = arith.constant 0 : i32
    return %arg0, %c0_i32 : i32, i32
  }
  func.func @transform_1(%arg0: i32) -> (i32, i32) {
    %c0_i32 = arith.constant 0 : i32
    %c0_i32_0 = arith.constant 0 : i32
    %c0_i32_1 = arith.constant 0 : i32
    return %c0_i32, %c0_i32_0 : i32, i32
  }
  func.func @transform_2(%arg0: i32) -> (i32, i32) {
    %c0_i32 = arith.constant 0 : i32
    %c0_i32_0 = arith.constant 0 : i32
    %c0_i32_1 = arith.constant 0 : i32
    return %c0_i32, %c0_i32_0 : i32, i32
  }
  func.func @transform_3(%arg0: i32) -> (i32, i32) {
    %c0_i32 = arith.constant 0 : i32
    %c0_i32_0 = arith.constant 0 : i32
    return %arg0, %c0_i32 : i32, i32
  }
}

module attributes {stable_mosaic.version = 11 : i64} {
  func.func @_conv2_in_lin_kernel(%arg0: i32, %arg1: memref<1x10x5x128xbf16, #tpu.memory_space<vmem>>, %arg2: memref<8x128x128xbf16, #tpu.memory_space<vmem>>, %arg3: memref<1x128xf32, #tpu.memory_space<vmem>>, %arg4: memref<4x4x128xf32, #tpu.memory_space<vmem>>, %arg5: memref<1x1xf32, #tpu.memory_space<vmem>>, %arg6: memref<1x1x1xf32, #tpu.memory_space<vmem>>, %arg7: memref<4x4x128xf32, #tpu.memory_space<vmem>>) attributes {dimension_semantics = [#tpu.dimension_semantics<parallel>], iteration_bounds = array<i64: 2>, scalar_prefetch = 0 : i64, scratch_operands = 1 : i64, tpu.core_type = #tpu.core_type<tc>, window_params = [{transform_indices = @transform_0, window_bounds = array<i64: 1, 10, 5, 128>}, {pipeline_mode = #tpu.pipeline_mode<synchronous>, transform_indices = @transform_1, window_bounds = array<i64: 8, 128, 128>}, {pipeline_mode = #tpu.pipeline_mode<synchronous>, transform_indices = @transform_2, window_bounds = array<i64: 1, 128>}, {pipeline_mode = #tpu.pipeline_mode<synchronous>, transform_indices = @transform_3, window_bounds = array<i64: 4, 4, 128>}, {pipeline_mode = #tpu.pipeline_mode<synchronous>, transform_indices = @transform_4, window_bounds = array<i64: 1, 1>}, {transform_indices = @transform_5, window_bounds = array<i64: 1, 1, 1>}]} {
    %cst = arith.constant 0.000000e+00 : f32
    %0 = vector.broadcast %cst : f32 to vector<1x128xf32>
    %c0_i32 = arith.constant 0 : i32
    %c4_i32 = arith.constant 4 : i32
    %1 = arith.addi %c0_i32, %c4_i32 : i32
    %c1_i32 = arith.constant 1 : i32
    %2 = scf.for %arg8 = %c0_i32 to %1 step %c1_i32 iter_args(%arg9 = %0) -> (vector<1x128xf32>)  : i32 {
      %cst_20 = arith.constant 0.000000e+00 : f32
      %27 = vector.broadcast %cst_20 : f32 to vector<4x128xf32>
      %c2_i32 = arith.constant 2 : i32
      %28 = arith.muli %c2_i32, %arg8 : i32
      %c0_i32_21 = arith.constant 0 : i32
      %29 = arith.addi %28, %c0_i32_21 : i32
      %c0_22 = arith.constant 0 : index
      %30 = arith.index_cast %29 : i32 to index
      %c0_23 = arith.constant 0 : index
      %c0_24 = arith.constant 0 : index
      %31 = vector.load %arg1[%c0_22, %30, %c0_23, %c0_24] : memref<1x10x5x128xbf16, #tpu.memory_space<vmem>>, vector<1x1x5x128xbf16>
      %32 = vector.shape_cast %31 : vector<1x1x5x128xbf16> to vector<5x128xbf16>
      %33 = vector.extract_strided_slice %32 {offsets = [0, 0], sizes = [4, 128], strides = [1, 1]} : vector<5x128xbf16> to vector<4x128xbf16>
      %c0_25 = arith.constant 0 : index
      %c0_26 = arith.constant 0 : index
      %c0_27 = arith.constant 0 : index
      %34 = vector.load %arg2[%c0_25, %c0_26, %c0_27] : memref<8x128x128xbf16, #tpu.memory_space<vmem>>, vector<1x128x128xbf16>
      %35 = vector.shape_cast %34 : vector<1x128x128xbf16> to vector<128x128xbf16>
      %cst_28 = arith.constant dense<0.000000e+00> : vector<4x128xf32>
      %36 = tpu.matmul %33, %35, %cst_28 {dimension_numbers = #tpu.dot_dimension_numbers<[1], [0], [0], [1], [0, 0, 1, 1], [], []>} : vector<4x128xbf16>, vector<128x128xbf16>, vector<4x128xf32> -> vector<4x128xf32>
      %37 = arith.addf %27, %36 : vector<4x128xf32>
      %38 = vector.extract_strided_slice %32 {offsets = [1, 0], sizes = [4, 128], strides = [1, 1]} : vector<5x128xbf16> to vector<4x128xbf16>
      %c1 = arith.constant 1 : index
      %c0_29 = arith.constant 0 : index
      %c0_30 = arith.constant 0 : index
      %39 = vector.load %arg2[%c1, %c0_29, %c0_30] : memref<8x128x128xbf16, #tpu.memory_space<vmem>>, vector<1x128x128xbf16>
      %40 = vector.shape_cast %39 : vector<1x128x128xbf16> to vector<128x128xbf16>
      %cst_31 = arith.constant dense<0.000000e+00> : vector<4x128xf32>
      %41 = tpu.matmul %38, %40, %cst_31 {dimension_numbers = #tpu.dot_dimension_numbers<[1], [0], [0], [1], [0, 0, 1, 1], [], []>} : vector<4x128xbf16>, vector<128x128xbf16>, vector<4x128xf32> -> vector<4x128xf32>
      %42 = arith.addf %37, %41 : vector<4x128xf32>
      %c2_i32_32 = arith.constant 2 : i32
      %43 = arith.muli %c2_i32_32, %arg8 : i32
      %c1_i32_33 = arith.constant 1 : i32
      %44 = arith.addi %43, %c1_i32_33 : i32
      %c0_34 = arith.constant 0 : index
      %45 = arith.index_cast %44 : i32 to index
      %c0_35 = arith.constant 0 : index
      %c0_36 = arith.constant 0 : index
      %46 = vector.load %arg1[%c0_34, %45, %c0_35, %c0_36] : memref<1x10x5x128xbf16, #tpu.memory_space<vmem>>, vector<1x1x5x128xbf16>
      %47 = vector.shape_cast %46 : vector<1x1x5x128xbf16> to vector<5x128xbf16>
      %48 = vector.extract_strided_slice %47 {offsets = [0, 0], sizes = [4, 128], strides = [1, 1]} : vector<5x128xbf16> to vector<4x128xbf16>
      %c2 = arith.constant 2 : index
      %c0_37 = arith.constant 0 : index
      %c0_38 = arith.constant 0 : index
      %49 = vector.load %arg2[%c2, %c0_37, %c0_38] : memref<8x128x128xbf16, #tpu.memory_space<vmem>>, vector<1x128x128xbf16>
      %50 = vector.shape_cast %49 : vector<1x128x128xbf16> to vector<128x128xbf16>
      %cst_39 = arith.constant dense<0.000000e+00> : vector<4x128xf32>
      %51 = tpu.matmul %48, %50, %cst_39 {dimension_numbers = #tpu.dot_dimension_numbers<[1], [0], [0], [1], [0, 0, 1, 1], [], []>} : vector<4x128xbf16>, vector<128x128xbf16>, vector<4x128xf32> -> vector<4x128xf32>
      %52 = arith.addf %42, %51 : vector<4x128xf32>
      %53 = vector.extract_strided_slice %47 {offsets = [1, 0], sizes = [4, 128], strides = [1, 1]} : vector<5x128xbf16> to vector<4x128xbf16>
      %c3 = arith.constant 3 : index
      %c0_40 = arith.constant 0 : index
      %c0_41 = arith.constant 0 : index
      %54 = vector.load %arg2[%c3, %c0_40, %c0_41] : memref<8x128x128xbf16, #tpu.memory_space<vmem>>, vector<1x128x128xbf16>
      %55 = vector.shape_cast %54 : vector<1x128x128xbf16> to vector<128x128xbf16>
      %cst_42 = arith.constant dense<0.000000e+00> : vector<4x128xf32>
      %56 = tpu.matmul %53, %55, %cst_42 {dimension_numbers = #tpu.dot_dimension_numbers<[1], [0], [0], [1], [0, 0, 1, 1], [], []>} : vector<4x128xbf16>, vector<128x128xbf16>, vector<4x128xf32> -> vector<4x128xf32>
      %57 = arith.addf %52, %56 : vector<4x128xf32>
      %c2_i32_43 = arith.constant 2 : i32
      %58 = arith.muli %c2_i32_43, %arg8 : i32
      %c2_i32_44 = arith.constant 2 : i32
      %59 = arith.addi %58, %c2_i32_44 : i32
      %c0_45 = arith.constant 0 : index
      %60 = arith.index_cast %59 : i32 to index
      %c0_46 = arith.constant 0 : index
      %c0_47 = arith.constant 0 : index
      %61 = vector.load %arg1[%c0_45, %60, %c0_46, %c0_47] : memref<1x10x5x128xbf16, #tpu.memory_space<vmem>>, vector<1x1x5x128xbf16>
      %62 = vector.shape_cast %61 : vector<1x1x5x128xbf16> to vector<5x128xbf16>
      %63 = vector.extract_strided_slice %62 {offsets = [0, 0], sizes = [4, 128], strides = [1, 1]} : vector<5x128xbf16> to vector<4x128xbf16>
      %c4 = arith.constant 4 : index
      %c0_48 = arith.constant 0 : index
      %c0_49 = arith.constant 0 : index
      %64 = vector.load %arg2[%c4, %c0_48, %c0_49] : memref<8x128x128xbf16, #tpu.memory_space<vmem>>, vector<1x128x128xbf16>
      %65 = vector.shape_cast %64 : vector<1x128x128xbf16> to vector<128x128xbf16>
      %cst_50 = arith.constant dense<0.000000e+00> : vector<4x128xf32>
      %66 = tpu.matmul %63, %65, %cst_50 {dimension_numbers = #tpu.dot_dimension_numbers<[1], [0], [0], [1], [0, 0, 1, 1], [], []>} : vector<4x128xbf16>, vector<128x128xbf16>, vector<4x128xf32> -> vector<4x128xf32>
      %67 = arith.addf %57, %66 : vector<4x128xf32>
      %68 = vector.extract_strided_slice %62 {offsets = [1, 0], sizes = [4, 128], strides = [1, 1]} : vector<5x128xbf16> to vector<4x128xbf16>
      %c5 = arith.constant 5 : index
      %c0_51 = arith.constant 0 : index
      %c0_52 = arith.constant 0 : index
      %69 = vector.load %arg2[%c5, %c0_51, %c0_52] : memref<8x128x128xbf16, #tpu.memory_space<vmem>>, vector<1x128x128xbf16>
      %70 = vector.shape_cast %69 : vector<1x128x128xbf16> to vector<128x128xbf16>
      %cst_53 = arith.constant dense<0.000000e+00> : vector<4x128xf32>
      %71 = tpu.matmul %68, %70, %cst_53 {dimension_numbers = #tpu.dot_dimension_numbers<[1], [0], [0], [1], [0, 0, 1, 1], [], []>} : vector<4x128xbf16>, vector<128x128xbf16>, vector<4x128xf32> -> vector<4x128xf32>
      %72 = arith.addf %67, %71 : vector<4x128xf32>
      %c2_i32_54 = arith.constant 2 : i32
      %73 = arith.muli %c2_i32_54, %arg8 : i32
      %c3_i32 = arith.constant 3 : i32
      %74 = arith.addi %73, %c3_i32 : i32
      %c0_55 = arith.constant 0 : index
      %75 = arith.index_cast %74 : i32 to index
      %c0_56 = arith.constant 0 : index
      %c0_57 = arith.constant 0 : index
      %76 = vector.load %arg1[%c0_55, %75, %c0_56, %c0_57] : memref<1x10x5x128xbf16, #tpu.memory_space<vmem>>, vector<1x1x5x128xbf16>
      %77 = vector.shape_cast %76 : vector<1x1x5x128xbf16> to vector<5x128xbf16>
      %78 = vector.extract_strided_slice %77 {offsets = [0, 0], sizes = [4, 128], strides = [1, 1]} : vector<5x128xbf16> to vector<4x128xbf16>
      %c6 = arith.constant 6 : index
      %c0_58 = arith.constant 0 : index
      %c0_59 = arith.constant 0 : index
      %79 = vector.load %arg2[%c6, %c0_58, %c0_59] : memref<8x128x128xbf16, #tpu.memory_space<vmem>>, vector<1x128x128xbf16>
      %80 = vector.shape_cast %79 : vector<1x128x128xbf16> to vector<128x128xbf16>
      %cst_60 = arith.constant dense<0.000000e+00> : vector<4x128xf32>
      %81 = tpu.matmul %78, %80, %cst_60 {dimension_numbers = #tpu.dot_dimension_numbers<[1], [0], [0], [1], [0, 0, 1, 1], [], []>} : vector<4x128xbf16>, vector<128x128xbf16>, vector<4x128xf32> -> vector<4x128xf32>
      %82 = arith.addf %72, %81 : vector<4x128xf32>
      %83 = vector.extract_strided_slice %77 {offsets = [1, 0], sizes = [4, 128], strides = [1, 1]} : vector<5x128xbf16> to vector<4x128xbf16>
      %c7 = arith.constant 7 : index
      %c0_61 = arith.constant 0 : index
      %c0_62 = arith.constant 0 : index
      %84 = vector.load %arg2[%c7, %c0_61, %c0_62] : memref<8x128x128xbf16, #tpu.memory_space<vmem>>, vector<1x128x128xbf16>
      %85 = vector.shape_cast %84 : vector<1x128x128xbf16> to vector<128x128xbf16>
      %cst_63 = arith.constant dense<0.000000e+00> : vector<4x128xf32>
      %86 = tpu.matmul %83, %85, %cst_63 {dimension_numbers = #tpu.dot_dimension_numbers<[1], [0], [0], [1], [0, 0, 1, 1], [], []>} : vector<4x128xbf16>, vector<128x128xbf16>, vector<4x128xf32> -> vector<4x128xf32>
      %87 = arith.addf %82, %86 : vector<4x128xf32>
      %c0_64 = arith.constant 0 : index
      %c0_65 = arith.constant 0 : index
      %88 = vector.load %arg3[%c0_64, %c0_65] : memref<1x128xf32, #tpu.memory_space<vmem>>, vector<1x128xf32>
      %89 = vector.broadcast %88 : vector<1x128xf32> to vector<4x128xf32>
      %90 = arith.addf %87, %89 : vector<4x128xf32>
      %91 = arith.index_cast %arg8 : i32 to index
      %c0_66 = arith.constant 0 : index
      %c0_67 = arith.constant 0 : index
      %92 = vector.load %arg7[%91, %c0_66, %c0_67] : memref<4x4x128xf32, #tpu.memory_space<vmem>>, vector<1x4x128xf32>
      %93 = vector.shape_cast %92 : vector<1x4x128xf32> to vector<4x128xf32>
      %94 = vector.shape_cast %90 : vector<4x128xf32> to vector<1x4x128xf32>
      tpu.vector_store %arg7[%91, %c0_66, %c0_67], %94 {strides = array<i32>} : memref<4x4x128xf32, #tpu.memory_space<vmem>>, vector<1x4x128xf32>,
      %cst_68 = arith.constant dense<0.000000e+00> : vector<128xf32>
      %95 = vector.multi_reduction <add>, %90, %cst_68 [0] : vector<4x128xf32> to vector<128xf32>
      %96 = vector.shape_cast %95 : vector<128xf32> to vector<1x128xf32>
      %97 = arith.addf %arg9, %96 : vector<1x128xf32>
      scf.yield %97 : vector<1x128xf32>
    }
    %c4_i32_0 = arith.constant 4 : i32
    %cst_1 = arith.constant 6.250000e-02 : f32
    %3 = vector.broadcast %cst_1 : f32 to vector<1x128xf32>
    %4 = arith.mulf %2, %3 : vector<1x128xf32>
    %cst_2 = arith.constant 0.000000e+00 : f32
    %5 = vector.broadcast %cst_2 : f32 to vector<1x128xf32>
    %c0_i32_3 = arith.constant 0 : i32
    %c4_i32_4 = arith.constant 4 : i32
    %6 = arith.addi %c0_i32_3, %c4_i32_4 : i32
    %c1_i32_5 = arith.constant 1 : i32
    %7 = scf.for %arg8 = %c0_i32_3 to %6 step %c1_i32_5 iter_args(%arg9 = %5) -> (vector<1x128xf32>)  : i32 {
      %27 = arith.index_cast %arg8 : i32 to index
      %c0_20 = arith.constant 0 : index
      %c0_21 = arith.constant 0 : index
      %28 = vector.load %arg7[%27, %c0_20, %c0_21] : memref<4x4x128xf32, #tpu.memory_space<vmem>>, vector<1x4x128xf32>
      %29 = vector.shape_cast %28 : vector<1x4x128xf32> to vector<4x128xf32>
      %30 = vector.broadcast %4 : vector<1x128xf32> to vector<4x128xf32>
      %31 = arith.subf %29, %30 : vector<4x128xf32>
      %32 = arith.mulf %31, %31 : vector<4x128xf32>
      %cst_22 = arith.constant dense<0.000000e+00> : vector<128xf32>
      %33 = vector.multi_reduction <add>, %32, %cst_22 [0] : vector<4x128xf32> to vector<128xf32>
      %34 = vector.shape_cast %33 : vector<128xf32> to vector<1x128xf32>
      %35 = arith.addf %arg9, %34 : vector<1x128xf32>
      scf.yield %35 : vector<1x128xf32>
    }
    %c4_i32_6 = arith.constant 4 : i32
    %cst_7 = arith.constant 6.250000e-02 : f32
    %8 = vector.broadcast %cst_7 : f32 to vector<1x128xf32>
    %9 = arith.mulf %7, %8 : vector<1x128xf32>
    %cst_8 = arith.constant 9.99999974E-6 : f32
    %10 = vector.broadcast %cst_8 : f32 to vector<1x128xf32>
    %11 = arith.addf %9, %10 : vector<1x128xf32>
    %12 = math.rsqrt %11 : vector<1x128xf32>
    %cst_9 = arith.constant 0.000000e+00 : f32
    %13 = vector.broadcast %cst_9 : f32 to vector<1x128xf32>
    %c0_i32_10 = arith.constant 0 : i32
    %c4_i32_11 = arith.constant 4 : i32
    %14 = arith.addi %c0_i32_10, %c4_i32_11 : i32
    %c1_i32_12 = arith.constant 1 : i32
    %15 = scf.for %arg8 = %c0_i32_10 to %14 step %c1_i32_12 iter_args(%arg9 = %13) -> (vector<1x128xf32>)  : i32 {
      %27 = arith.index_cast %arg8 : i32 to index
      %c0_20 = arith.constant 0 : index
      %c0_21 = arith.constant 0 : index
      %28 = vector.load %arg7[%27, %c0_20, %c0_21] : memref<4x4x128xf32, #tpu.memory_space<vmem>>, vector<1x4x128xf32>
      %29 = vector.shape_cast %28 : vector<1x4x128xf32> to vector<4x128xf32>
      %30 = vector.broadcast %4 : vector<1x128xf32> to vector<4x128xf32>
      %31 = arith.subf %29, %30 : vector<4x128xf32>
      %32 = vector.broadcast %12 : vector<1x128xf32> to vector<4x128xf32>
      %33 = arith.mulf %31, %32 : vector<4x128xf32>
      %cst_22 = arith.constant 2.000000e-01 : f32
      %34 = vector.broadcast %cst_22 : f32 to vector<4x128xf32>
      %35 = arith.mulf %34, %33 : vector<4x128xf32>
      %36 = arith.maximumf %33, %35 : vector<4x128xf32>
      %37 = arith.index_cast %arg8 : i32 to index
      %c0_23 = arith.constant 0 : index
      %c0_24 = arith.constant 0 : index
      %38 = vector.load %arg4[%37, %c0_23, %c0_24] : memref<4x4x128xf32, #tpu.memory_space<vmem>>, vector<1x4x128xf32>
      %39 = vector.shape_cast %38 : vector<1x4x128xf32> to vector<4x128xf32>
      %40 = arith.mulf %36, %39 : vector<4x128xf32>
      %cst_25 = arith.constant dense<0.000000e+00> : vector<128xf32>
      %41 = vector.multi_reduction <add>, %40, %cst_25 [0] : vector<4x128xf32> to vector<128xf32>
      %42 = vector.shape_cast %41 : vector<128xf32> to vector<1x128xf32>
      %43 = arith.addf %arg9, %42 : vector<1x128xf32>
      scf.yield %43 : vector<1x128xf32>
    }
    %c4_i32_13 = arith.constant 4 : i32
    %cst_14 = arith.constant dense<0.000000e+00> : vector<1xf32>
    %16 = vector.multi_reduction <add>, %15, %cst_14 [1] : vector<1x128xf32> to vector<1xf32>
    %17 = vector.shape_cast %16 : vector<1xf32> to vector<1x1xf32>
    %c0 = arith.constant 0 : index
    %c0_15 = arith.constant 0 : index
    %18 = vector.load %arg5[%c0, %c0_15] : memref<1x1xf32, #tpu.memory_space<vmem>>, vector<1x1xf32>
    %19 = arith.addf %17, %18 : vector<1x1xf32>
    %20 = arith.negf %19 : vector<1x1xf32>
    %21 = math.exp %20 : vector<1x1xf32>
    %cst_16 = arith.constant 1.000000e+00 : f32
    %22 = vector.broadcast %cst_16 : f32 to vector<1x1xf32>
    %23 = arith.addf %22, %21 : vector<1x1xf32>
    %24 = arith.divf %22, %23 : vector<1x1xf32>
    %25 = vector.shape_cast %24 : vector<1x1xf32> to vector<1x1x1xf32>
    %c0_17 = arith.constant 0 : index
    %c0_18 = arith.constant 0 : index
    %c0_19 = arith.constant 0 : index
    %26 = vector.load %arg6[%c0_17, %c0_18, %c0_19] : memref<1x1x1xf32, #tpu.memory_space<vmem>>, vector<1x1x1xf32>
    tpu.vector_store %arg6[%c0_17, %c0_18, %c0_19], %25 {strides = array<i32>} : memref<1x1x1xf32, #tpu.memory_space<vmem>>, vector<1x1x1xf32>,
    return
  }
  func.func @transform_0(%arg0: i32) -> (i32, i32, i32, i32) {
    %c0_i32 = arith.constant 0 : i32
    %c0_i32_0 = arith.constant 0 : i32
    %c0_i32_1 = arith.constant 0 : i32
    %c0_i32_2 = arith.constant 0 : i32
    return %arg0, %c0_i32, %c0_i32_0, %c0_i32_1 : i32, i32, i32, i32
  }
  func.func @transform_1(%arg0: i32) -> (i32, i32, i32) {
    %c0_i32 = arith.constant 0 : i32
    %c0_i32_0 = arith.constant 0 : i32
    %c0_i32_1 = arith.constant 0 : i32
    %c0_i32_2 = arith.constant 0 : i32
    return %c0_i32, %c0_i32_0, %c0_i32_1 : i32, i32, i32
  }
  func.func @transform_2(%arg0: i32) -> (i32, i32) {
    %c0_i32 = arith.constant 0 : i32
    %c0_i32_0 = arith.constant 0 : i32
    %c0_i32_1 = arith.constant 0 : i32
    return %c0_i32, %c0_i32_0 : i32, i32
  }
  func.func @transform_3(%arg0: i32) -> (i32, i32, i32) {
    %c0_i32 = arith.constant 0 : i32
    %c0_i32_0 = arith.constant 0 : i32
    %c0_i32_1 = arith.constant 0 : i32
    %c0_i32_2 = arith.constant 0 : i32
    return %c0_i32, %c0_i32_0, %c0_i32_1 : i32, i32, i32
  }
  func.func @transform_4(%arg0: i32) -> (i32, i32) {
    %c0_i32 = arith.constant 0 : i32
    %c0_i32_0 = arith.constant 0 : i32
    %c0_i32_1 = arith.constant 0 : i32
    return %c0_i32, %c0_i32_0 : i32, i32
  }
  func.func @transform_5(%arg0: i32) -> (i32, i32, i32) {
    %c0_i32 = arith.constant 0 : i32
    %c0_i32_0 = arith.constant 0 : i32
    %c0_i32_1 = arith.constant 0 : i32
    return %arg0, %c0_i32, %c0_i32_0 : i32, i32, i32
  }
}

</mosaic_0001>

<llo_original>
// kernel: discriminator_forward.2
$region0: #{discriminator_forward.2}
  #allocation0 [shape = 'u32[]', space=smem, size = 0x4, offset = 0x4, fixed_abs, tag = 'smem constant byte address 0x4 - core index']
  #allocation1 [shape = 'u32[144,128]{1,0:T(1,128)}', space=vmem, size = 0x12000, scoped, tag = 'internal scratch']
  %s0 = inlined_call_operand.vmem [shape: bf16[128,32], index: 0, kind: input, shape index: {}]
  %s1 = inlined_call_operand.vmem [shape: bf16[32,64], index: 1, kind: input, shape index: {}]
  %s2 = inlined_call_operand.vmem [shape: f32[1,64], index: 2, kind: input, shape index: {}]
  %s3 = inlined_call_operand.vmem [shape: bf16[128,64], index: 3, kind: output, shape index: {}]
  %s4 = sld [smem:[#allocation0]]
  $region22: #{discriminator_forward.2} parent=0
    _
  %s6 = ssub.s32 1, %s4
  %s7 = scalar_select 0, %s6, %s4
  // Predicated region
  $region2: #{discriminator_forward.2} parent=0 // pred_check
    _
  $region3: #{discriminator_forward.2} parent=0 // pred_check_branch
    %9 = sbr.rel (0) target = $region5
  $region4: #{discriminator_forward.2} parent=0 // pred_region
    _
  $region5: #{discriminator_forward.2} parent=0 // pred_fallthru
    _
  // Predicated region
  $region6: #{discriminator_forward.2} parent=0 // pred_check
    _
  $region7: #{discriminator_forward.2} parent=0 // pred_check_branch
    %11 = sbr.rel (0) target = $region9
  $region8: #{discriminator_forward.2} parent=0 // pred_region
    _
  $region9: #{discriminator_forward.2} parent=0 // pred_fallthru
    _
  // Predicated region
  $region10: #{discriminator_forward.2} parent=0 // pred_check
    _
  $region11: #{discriminator_forward.2} parent=0 // pred_check_branch
    %13 = sbr.rel (0) target = $region13
  $region12: #{discriminator_forward.2} parent=0 // pred_region
    _
  $region13: #{discriminator_forward.2} parent=0 // pred_fallthru
    _
  %v15 = vld [vmem:[%s0] sm:$0xf]
  %v16 = vld [vmem:[%s0 + $0x4] sm:$0xf]
  %v17 = vld [vmem:[%s0 + $0x8] sm:$0xf]
  %v18 = vld [vmem:[%s0 + $0xc] sm:$0xf]
  %v19 = vld [vmem:[%s0 + $0x10] sm:$0xf]
  %v20 = vld [vmem:[%s0 + $0x14] sm:$0xf]
  %v21 = vld [vmem:[%s0 + $0x18] sm:$0xf]
  %v22 = vld [vmem:[%s0 + $0x1c] sm:$0xf]
  %v23 = vld [vmem:[%s0 + $0x20] sm:$0xf]
  %v24 = vld [vmem:[%s0 + $0x24] sm:$0xf]
  %v25 = vld [vmem:[%s0 + $0x28] sm:$0xf]
  %v26 = vld [vmem:[%s0 + $0x2c] sm:$0xf]
  %v27 = vld [vmem:[%s0 + $0x30] sm:$0xf]
  %v28 = vld [vmem:[%s0 + $0x34] sm:$0xf]
  %v29 = vld [vmem:[%s0 + $0x38] sm:$0xf]
  %v30 = vld [vmem:[%s0 + $0x3c] sm:$0xf]
  %v31 = vld [vmem:[%s1] sm:$0xf]
  %v32 = vld [vmem:[%s1 + $0x4] sm:$0xf]
  %v33 = vld [vmem:[%s1 + $0x8] sm:$0xf]
  %v34 = vld [vmem:[%s1 + $0xc] sm:$0xf]
  %v35 = vld [vmem:[%s2] sm:$0x1]
  %v37 = vlaneseq
  %v38 = vshrl.u32 %v37, 7
  %v39 = vsub.s32 0, %v38
  %v40 = vrot.slane %v35, %v39
  %v58 = vunpack.c.l.b16 %v15
  %v59 = vunpack.c.l.b16 %v16
  %v60 = vunpack.c.l.b16 %v17
  %v61 = vunpack.c.l.b16 %v18
  %v62 = vunpack.c.l.b16 %v19
  %v63 = vunpack.c.l.b16 %v20
  %v64 = vunpack.c.l.b16 %v21
  %v65 = vunpack.c.l.b16 %v22
  %v66 = vunpack.c.l.b16 %v23
  %v67 = vunpack.c.l.b16 %v24
  %v68 = vunpack.c.l.b16 %v25
  %v69 = vunpack.c.l.b16 %v26
  %v70 = vunpack.c.l.b16 %v27
  %v71 = vunpack.c.l.b16 %v28
  %v72 = vunpack.c.l.b16 %v29
  %v73 = vunpack.c.l.b16 %v30
  %v74 = vpack.c.b16 %v59, %v58
  %v75 = vpack.c.b16 %v61, %v60
  %v76 = vpack.c.b16 %v63, %v62
  %v77 = vpack.c.b16 %v65, %v64
  %v78 = vpack.c.b16 %v67, %v66
  %v79 = vpack.c.b16 %v69, %v68
  %v80 = vpack.c.b16 %v71, %v70
  %v81 = vpack.c.b16 %v73, %v72
  %v86 = vunpack.c.l.b16 %v31
  %v87 = vunpack.c.l.b16 %v32
  %v88 = vunpack.c.l.b16 %v33
  %v89 = vunpack.c.l.b16 %v34
  %v90 = vpack.c.b16 %v87, %v86
  %v91 = vpack.c.b16 %v89, %v88
  %vm94 = vcmask 261120
  %v96 = vsel %vm94, %v74, 0
  %v99 = vsel %vm94, %v75, 0
  %v102 = vsel %vm94, %v76, 0
  %v105 = vsel %vm94, %v77, 0
  %v108 = vsel %vm94, %v78, 0
  %v111 = vsel %vm94, %v79, 0
  %v114 = vsel %vm94, %v80, 0
  %v117 = vsel %vm94, %v81, 0
  %119 = vmatprep.subr.bf16.mxu0 0
  %120 = vmatpush1.bf16.msra.mxu0 %v90
  %121 = vmatprep.subr.bf16.mxu0 0
  %122 = vmatpush1.bf16.msra.mxu0 %v91
  %123 = vmatprep.subr.bf16.mxu0 0
  %124 = vmatpush1.bf16.msra.mxu0 0
  %125 = vmatprep.subr.bf16.mxu0 0
  %126 = vmatpush1.bf16.msra.mxu0 0
  %127 = vmatprep.subr.bf16.mxu0 0
  %128 = vmatpush1.bf16.msra.mxu0 0
  %129 = vmatprep.subr.bf16.mxu0 0
  %130 = vmatpush1.bf16.msra.mxu0 0
  %131 = vmatprep.subr.bf16.mxu0 0
  %132 = vmatpush1.bf16.msra.mxu0 0
  %133 = vmatprep.subr.bf16.mxu0 0
  %134 = vmatpush1.bf16.msra.mxu0 0
  %135 = vmatprep.subr.bf16.mxu0 0
  %136 = vmatpush1.bf16.msra.mxu0 0
  %137 = vmatprep.subr.bf16.mxu0 0
  %138 = vmatpush1.bf16.msra.mxu0 0
  %139 = vmatprep.subr.bf16.mxu0 0
  %140 = vmatpush1.bf16.msra.mxu0 0
  %141 = vmatprep.subr.bf16.mxu0 0
  %142 = vmatpush1.bf16.msra.mxu0 0
  %143 = vmatprep.subr.bf16.mxu0 0
  %144 = vmatpush1.bf16.msra.mxu0 0
  %145 = vmatprep.subr.bf16.mxu0 0
  %146 = vmatpush1.bf16.msra.mxu0 0
  %147 = vmatprep.subr.bf16.mxu0 0
  %148 = vmatpush1.bf16.msra.mxu0 0
  %149 = vmatprep.subr.bf16.mxu0 0
  %150 = vmatpush1.bf16.msra.mxu0 0
  %151 = vmatprep.mubr.bf16.mxu0 0
  %152 = vmatmul.mubr.bf16.gmra.mrb[0].mxu0 %v96
  %v153 = vpop.f32.mrb[0].mxu0
  %v154 = vadd.f32 %v40, %v153
  %v155 = vpop.f32.mrb[0].mxu0
  %v156 = vpop.f32.mrb[0].mxu0
  %v157 = vadd.f32 %v40, %v156
  %v158 = vpop.f32.mrb[0].mxu0
  %159 = vmatprep.mubr.bf16.mxu0 0
  %160 = vmatmul.mubr.bf16.gmra.mrb[0].mxu0 %v99
  %v161 = vpop.f32.mrb[0].mxu0
  %v162 = vadd.f32 %v40, %v161
  %v163 = vpop.f32.mrb[0].mxu0
  %v164 = vpop.f32.mrb[0].mxu0
  %v165 = vadd.f32 %v40, %v164
  %v166 = vpop.f32.mrb[0].mxu0
  %167 = vmatprep.mubr.bf16.mxu0 0
  %168 = vmatmul.mubr.bf16.gmra.mrb[0].mxu0 %v102
  %v169 = vpop.f32.mrb[0].mxu0
  %v170 = vadd.f32 %v40, %v169
  %v171 = vpop.f32.mrb[0].mxu0
  %v172 = vpop.f32.mrb[0].mxu0
  %v173 = vadd.f32 %v40, %v172
  %v174 = vpop.f32.mrb[0].mxu0
  %175 = vmatprep.mubr.bf16.mxu0 0
  %176 = vmatmul.mubr.bf16.gmra.mrb[0].mxu0 %v105
  %v177 = vpop.f32.mrb[0].mxu0
  %v178 = vadd.f32 %v40, %v177
  %v179 = vpop.f32.mrb[0].mxu0
  %v180 = vpop.f32.mrb[0].mxu0
  %v181 = vadd.f32 %v40, %v180
  %v182 = vpop.f32.mrb[0].mxu0
  %183 = vmatprep.mubr.bf16.mxu0 0
  %184 = vmatmul.mubr.bf16.gmra.mrb[0].mxu0 %v108
  %v185 = vpop.f32.mrb[0].mxu0
  %v186 = vadd.f32 %v40, %v185
  %v187 = vpop.f32.mrb[0].mxu0
  %v188 = vpop.f32.mrb[0].mxu0
  %v189 = vadd.f32 %v40, %v188
  %v190 = vpop.f32.mrb[0].mxu0
  %191 = vmatprep.mubr.bf16.mxu0 0
  %192 = vmatmul.mubr.bf16.gmra.mrb[0].mxu0 %v111
  %v193 = vpop.f32.mrb[0].mxu0
  %v194 = vadd.f32 %v40, %v193
  %v195 = vpop.f32.mrb[0].mxu0
  %v196 = vpop.f32.mrb[0].mxu0
  %v197 = vadd.f32 %v40, %v196
  %v198 = vpop.f32.mrb[0].mxu0
  %199 = vmatprep.mubr.bf16.mxu0 0
  %200 = vmatmul.mubr.bf16.gmra.mrb[0].mxu0 %v114
  %v201 = vpop.f32.mrb[0].mxu0
  %v202 = vadd.f32 %v40, %v201
  %v203 = vpop.f32.mrb[0].mxu0
  %v204 = vpop.f32.mrb[0].mxu0
  %v205 = vadd.f32 %v40, %v204
  %v206 = vpop.f32.mrb[0].mxu0
  %207 = vmatprep.mubr.bf16.mxu0 0
  %208 = vmatmul.mubr.bf16.gmra.mrb[0].mxu0 %v117
  %v209 = vpop.f32.mrb[0].mxu0
  %v210 = vadd.f32 %v40, %v209
  %v211 = vpop.f32.mrb[0].mxu0
  %v212 = vpop.f32.mrb[0].mxu0
  %v213 = vadd.f32 %v40, %v212
  %v214 = vpop.f32.mrb[0].mxu0
  %215 = vdwg.mxu0
  %v216 = vmul.f32 %v154, 0.2
  %v217 = vmul.f32 %v157, 0.2
  %v218 = vmul.f32 %v162, 0.2
  %v219 = vmul.f32 %v165, 0.2
  %v220 = vmul.f32 %v170, 0.2
  %v221 = vmul.f32 %v173, 0.2
  %v222 = vmul.f32 %v178, 0.2
  %v223 = vmul.f32 %v181, 0.2
  %v224 = vmul.f32 %v186, 0.2
  %v225 = vmul.f32 %v189, 0.2
  %v226 = vmul.f32 %v194, 0.2
  %v227 = vmul.f32 %v197, 0.2
  %v228 = vmul.f32 %v202, 0.2
  %v229 = vmul.f32 %v205, 0.2
  %v230 = vmul.f32 %v210, 0.2
  %v231 = vmul.f32 %v213, 0.2
  %v232 = vmax.f32 %v154, %v216
  %v233 = vmax.f32 %v157, %v217
  %v234 = vmax.f32 %v162, %v218
  %v235 = vmax.f32 %v165, %v219
  %v236 = vmax.f32 %v170, %v220
  %v237 = vmax.f32 %v173, %v221
  %v238 = vmax.f32 %v178, %v222
  %v239 = vmax.f32 %v181, %v223
  %v240 = vmax.f32 %v186, %v224
  %v241 = vmax.f32 %v189, %v225
  %v242 = vmax.f32 %v194, %v226
  %v243 = vmax.f32 %v197, %v227
  %v244 = vmax.f32 %v202, %v228
  %v245 = vmax.f32 %v205, %v229
  %v246 = vmax.f32 %v210, %v230
  %v247 = vmax.f32 %v213, %v231
  %v248 = vpack.c.bf16 %v233, %v232
  %v249 = vpack.c.bf16 %v235, %v234
  %v250 = vpack.c.bf16 %v237, %v236
  %v251 = vpack.c.bf16 %v239, %v238
  %v252 = vpack.c.bf16 %v241, %v240
  %v253 = vpack.c.bf16 %v243, %v242
  %v254 = vpack.c.bf16 %v245, %v244
  %v255 = vpack.c.bf16 %v247, %v246
  %v264 = vunpack.c.l.b16 %v248
  %v265 = vunpack.c.h.b16 %v248
  %v266 = vunpack.c.l.b16 %v249
  %v267 = vunpack.c.h.b16 %v249
  %v268 = vunpack.c.l.b16 %v250
  %v269 = vunpack.c.h.b16 %v250
  %v270 = vunpack.c.l.b16 %v251
  %v271 = vunpack.c.h.b16 %v251
  %v272 = vunpack.c.l.b16 %v252
  %v273 = vunpack.c.h.b16 %v252
  %v274 = vunpack.c.l.b16 %v253
  %v275 = vunpack.c.h.b16 %v253
  %v276 = vunpack.c.l.b16 %v254
  %v277 = vunpack.c.h.b16 %v254
  %v278 = vunpack.c.l.b16 %v255
  %v279 = vunpack.c.h.b16 %v255
  %v280 = vpack.c.b16 %v264, %v264
  %v281 = vpack.c.b16 %v265, %v265
  %v282 = vpack.c.b16 %v266, %v266
  %v283 = vpack.c.b16 %v267, %v267
  %v284 = vpack.c.b16 %v268, %v268
  %v285 = vpack.c.b16 %v269, %v269
  %v286 = vpack.c.b16 %v270, %v270
  %v287 = vpack.c.b16 %v271, %v271
  %v288 = vpack.c.b16 %v272, %v272
  %v289 = vpack.c.b16 %v273, %v273
  %v290 = vpack.c.b16 %v274, %v274
  %v291 = vpack.c.b16 %v275, %v275
  %v292 = vpack.c.b16 %v276, %v276
  %v293 = vpack.c.b16 %v277, %v277
  %v294 = vpack.c.b16 %v278, %v278
  %v295 = vpack.c.b16 %v279, %v279
  %vm312 = vcmask 519168
  %313 = vst.msk [vmem:[%s3] sm:$0xf] %vm312, %v280
  %314 = vst.msk [vmem:[%s3 + $0x4] sm:$0xf] %vm312, %v281
  %315 = vst.msk [vmem:[%s3 + $0x8] sm:$0xf] %vm312, %v282
  %316 = vst.msk [vmem:[%s3 + $0xc] sm:$0xf] %vm312, %v283
  %317 = vst.msk [vmem:[%s3 + $0x10] sm:$0xf] %vm312, %v284
  %318 = vst.msk [vmem:[%s3 + $0x14] sm:$0xf] %vm312, %v285
  %319 = vst.msk [vmem:[%s3 + $0x18] sm:$0xf] %vm312, %v286
  %320 = vst.msk [vmem:[%s3 + $0x1c] sm:$0xf] %vm312, %v287
  %321 = vst.msk [vmem:[%s3 + $0x20] sm:$0xf] %vm312, %v288
  %322 = vst.msk [vmem:[%s3 + $0x24] sm:$0xf] %vm312, %v289
  %323 = vst.msk [vmem:[%s3 + $0x28] sm:$0xf] %vm312, %v290
  %324 = vst.msk [vmem:[%s3 + $0x2c] sm:$0xf] %vm312, %v291
  %325 = vst.msk [vmem:[%s3 + $0x30] sm:$0xf] %vm312, %v292
  %326 = vst.msk [vmem:[%s3 + $0x34] sm:$0xf] %vm312, %v293
  %327 = vst.msk [vmem:[%s3 + $0x38] sm:$0xf] %vm312, %v294
  %328 = vst.msk [vmem:[%s3 + $0x3c] sm:$0xf] %vm312, %v295
  // Predicated region
  $region14: #{discriminator_forward.2} parent=0 // pred_check
    _
  $region15: #{discriminator_forward.2} parent=0 // pred_check_branch
    %330 = sbr.rel (0) target = $region17
  $region16: #{discriminator_forward.2} parent=0 // pred_region
    _
  $region17: #{discriminator_forward.2} parent=0 // pred_fallthru
    _
  // Predicated region
  $region18: #{discriminator_forward.2} parent=0 // pred_check
    _
  $region19: #{discriminator_forward.2} parent=0 // pred_check_branch
    %332 = sbr.rel (0) target = $region21
  $region20: #{discriminator_forward.2} parent=0 // pred_region
    _
  $region21: #{discriminator_forward.2} parent=0 // pred_fallthru
    _

// kernel: discriminator_forward.3
$region0: #{discriminator_forward.3}
  #allocation0 [shape = 'u32[]', space=smem, size = 0x4, offset = 0x4, fixed_abs, tag = 'smem constant byte address 0x4 - core index']
  #allocation1 [shape = 'u32[144,128]{1,0:T(1,128)}', space=vmem, size = 0x12000, scoped, tag = 'internal scratch']
  #allocation2 [shape = 'f32[4,4,128]{2,1,0:T(4,128)}', space=vmem, size = 0x2000, scoped, tag = 'scratch operand']
  #allocation3 [shape = 'f32[1,1]{1,0:T(1,128)S(1)}', space=vmem, size = 0x200, scoped, tag = 'scoped memory for discriminator_forward.3']
  %s0 = inlined_call_operand.vmem [shape: bf16[2,10,5,128], index: 0, kind: input, shape index: {}]
  %s1 = inlined_call_operand.vmem [shape: bf16[8,128,128], index: 1, kind: input, shape index: {}]
  %s2 = inlined_call_operand.vmem [shape: f32[1,128], index: 2, kind: input, shape index: {}]
  %s3 = inlined_call_operand.vmem [shape: f32[4,4,128], index: 3, kind: input, shape index: {}]
  %s4 = inlined_call_operand.<no memory space> [shape: f32[1,1], index: 4, kind: input, shape index: {}]
  %s5 = inlined_call_operand.vmem [shape: f32[2,1,1], index: 5, kind: output, shape index: {}]
  %s6 = sld [smem:[#allocation0]]
  $region74: #{discriminator_forward.3} parent=0
    _
  %s8 = ssub.s32 1, %s6
  %s9 = scalar_select 0, %s8, %s6
  %v10 = vstv %s4
  %11 = vst [vmem:[#allocation3] sm:$0x1] %v10
  loop: start=0, step=1, limit=4
  $region2: #{discriminator_forward.3} parent=0 // loop_pre_header
    _
  $region3: #{discriminator_forward.3} parent=0 // loop_header
    %s13 = sphi 0, %s17
    %p14 = scmp.ge.s32.totalorder %s13, 4
    %s23 = sphi 0, %s25
    %s26 = sphi 0, %s23
    %s27 = sphi 0, %s26
    %s43 = sphi 0, %s27
    %s47 = sphi 0, %s47
    %s49 = sphi 0, %s47
    %s50 = sphi 0, %s49
    %s64 = sphi 0, %s50
    %s68 = sphi 0, %s68
    %s70 = sphi 0, %s68
    %s71 = sphi 0, %s70
    %s85 = sphi 0, %s71
    %s89 = sphi 0, %s89
    %s91 = sphi 0, %s89
    %s92 = sphi 0, %s91
    %s106 = sphi 0, %s92
    %s110 = sphi 0, %s110
    %s112 = sphi 0, %s110
    %s113 = sphi 0, %s112
    %s127 = sphi 0, %s113
    %s133 = sphi 0, %s135
    %s136 = sphi 0, %s133
    %s137 = sphi 0, %s136
    %s153 = sphi 0, %s137
  $region4: #{discriminator_forward.3} parent=0 // loop_header_branch
    %16 = sbr.rel (%p14) target = $region8
  $region5: #{discriminator_forward.3} parent=0 // loop_body
    %s18 = ssub.s32 %s13, 1
    %s19 = ssub.s32 %s13, 2
    %s20 = sadd.s32 %s13, 1
    %s21 = ssub.s32 %s13, %s20
    %p22 = scmp.eq.s32.totalorder %s21, 0
    %s24 = sadd.s32 %s23, 1
    %s25 = scalar_select %p22, %s23, %s24
    %p28 = pneg %p22
    %p29 = scmp.eq.s32.totalorder %s13, 1
    %p30 = por %p28, %p29
    %p31 = scmp.ne.s32.totalorder %s23, %s26
    %p32 = scmp.eq.s32.totalorder %s13, 0
    %p33 = por %p31, %p32
    %p34 = scmp.ne.s32.totalorder %s23, %s26
    %p35 = scmp.eq.s32.totalorder %s18, 1
    %p36 = por %p34, %p35
    %p37 = scmp.ne.s32.totalorder %s26, %s27
    %p38 = scmp.eq.s32.totalorder %s18, 0
    %p39 = por %p37, %p38
    %p40 = scmp.ne.s32.totalorder %s26, %s27
    %p41 = scmp.eq.s32.totalorder %s19, 1
    %p42 = por %p40, %p41
    %p44 = scmp.ne.s32.totalorder %s27, %s43
    %p45 = scmp.eq.s32.totalorder %s19, 0
    %p46 = por %p44, %p45
    %s48 = sadd.s32 %s47, 1
    %p51 = scmp.eq.s32.totalorder %s13, 1
    %p52 = scmp.ne.s32.totalorder %s47, %s49
    %p53 = scmp.eq.s32.totalorder %s13, 0
    %p54 = por %p52, %p53
    %p55 = scmp.ne.s32.totalorder %s47, %s49
    %p56 = scmp.eq.s32.totalorder %s18, 1
    %p57 = por %p55, %p56
    %p58 = scmp.ne.s32.totalorder %s49, %s50
    %p59 = scmp.eq.s32.totalorder %s18, 0
    %p60 = por %p58, %p59
    %p61 = scmp.ne.s32.totalorder %s49, %s50
    %p62 = scmp.eq.s32.totalorder %s19, 1
    %p63 = por %p61, %p62
    %p65 = scmp.ne.s32.totalorder %s50, %s64
    %p66 = scmp.eq.s32.totalorder %s19, 0
    %p67 = por %p65, %p66
    %s69 = sadd.s32 %s68, 1
    %p72 = scmp.eq.s32.totalorder %s13, 1
    %p73 = scmp.ne.s32.totalorder %s68, %s70
    %p74 = scmp.eq.s32.totalorder %s13, 0
    %p75 = por %p73, %p74
    %p76 = scmp.ne.s32.totalorder %s68, %s70
    %p77 = scmp.eq.s32.totalorder %s18, 1
    %p78 = por %p76, %p77
    %p79 = scmp.ne.s32.totalorder %s70, %s71
    %p80 = scmp.eq.s32.totalorder %s18, 0
    %p81 = por %p79, %p80
    %p82 = scmp.ne.s32.totalorder %s70, %s71
    %p83 = scmp.eq.s32.totalorder %s19, 1
    %p84 = por %p82, %p83
    %p86 = scmp.ne.s32.totalorder %s71, %s85
    %p87 = scmp.eq.s32.totalorder %s19, 0
    %p88 = por %p86, %p87
    %s90 = sadd.s32 %s89, 1
    %p93 = scmp.eq.s32.totalorder %s13, 1
    %p94 = scmp.ne.s32.totalorder %s89, %s91
    %p95 = scmp.eq.s32.totalorder %s13, 0
    %p96 = por %p94, %p95
    %p97 = scmp.ne.s32.totalorder %s89, %s91
    %p98 = scmp.eq.s32.totalorder %s18, 1
    %p99 = por %p97, %p98
    %p100 = scmp.ne.s32.totalorder %s91, %s92
    %p101 = scmp.eq.s32.totalorder %s18, 0
    %p102 = por %p100, %p101
    %p103 = scmp.ne.s32.totalorder %s91, %s92
    %p104 = scmp.eq.s32.totalorder %s19, 1
    %p105 = por %p103, %p104
    %p107 = scmp.ne.s32.totalorder %s92, %s106
    %p108 = scmp.eq.s32.totalorder %s19, 0
    %p109 = por %p107, %p108
    %s111 = sadd.s32 %s110, 1
    %p114 = scmp.eq.s32.totalorder %s13, 1
    %p115 = scmp.ne.s32.totalorder %s110, %s112
    %p116 = scmp.eq.s32.totalorder %s13, 0
    %p117 = por %p115, %p116
    %p118 = scmp.ne.s32.totalorder %s110, %s112
    %p119 = scmp.eq.s32.totalorder %s18, 1
    %p120 = por %p118, %p119
    %p121 = scmp.ne.s32.totalorder %s112, %s113
    %p122 = scmp.eq.s32.totalorder %s18, 0
    %p123 = por %p121, %p122
    %p124 = scmp.ne.s32.totalorder %s112, %s113
    %p125 = scmp.eq.s32.totalorder %s19, 1
    %p126 = por %p124, %p125
    %p128 = scmp.ne.s32.totalorder %s113, %s127
    %p129 = scmp.eq.s32.totalorder %s19, 0
    %p130 = por %p128, %p129
    %s131 = ssub.s32 %s13, %s20
    %p132 = scmp.eq.s32.totalorder %s131, 0
    %s134 = sadd.s32 %s133, 1
    %s135 = scalar_select %p132, %s133, %s134
    %p138 = pneg %p132
    %p139 = scmp.eq.s32.totalorder %s13, 1
    %p140 = por %p138, %p139
    %p141 = scmp.ne.s32.totalorder %s133, %s136
    %p142 = scmp.eq.s32.totalorder %s13, 0
    %p143 = por %p141, %p142
    %p144 = scmp.ne.s32.totalorder %s133, %s136
    %p145 = scmp.eq.s32.totalorder %s18, 1
    %p146 = por %p144, %p145
    %p147 = scmp.ne.s32.totalorder %s136, %s137
    %p148 = scmp.eq.s32.totalorder %s18, 0
    %p149 = por %p147, %p148
    %p150 = scmp.ne.s32.totalorder %s136, %s137
    %p151 = scmp.eq.s32.totalorder %s19, 1
    %p152 = por %p150, %p151
    %p154 = scmp.ne.s32.totalorder %s137, %s153
    %p155 = scmp.eq.s32.totalorder %s19, 0
    %p156 = por %p154, %p155
    %p157 = scmp.le.s32.totalorder 1, %s13
    %p158 = scmp.lt.s32.totalorder %s13, 3
    %p159 = pnand %p157, %p158
    %p160 = pneg %p159
    // Predicated region
    $region9: #{discriminator_forward.3} parent=5 // pred_check
      _
    $region10: #{discriminator_forward.3} parent=5 // pred_check_branch
      %162 = sbr.rel (%p159) target = $region12
    $region11: #{discriminator_forward.3} parent=5 // pred_region
      %s163 = ssub.s32 %s13, 1
      // Predicated region
      $region13: #{discriminator_forward.3} parent=11 // pred_check
        %p164 = pneg %p60
      $region14: #{discriminator_forward.3} parent=11 // pred_check_branch
        %166 = sbr.rel (%p164) target = $region16
      $region15: #{discriminator_forward.3} parent=11 // pred_region
        _
      $region16: #{discriminator_forward.3} parent=11 // pred_fallthru
        _
      // Predicated region
      $region17: #{discriminator_forward.3} parent=11 // pred_check
        %p167 = pneg %p81
      $region18: #{discriminator_forward.3} parent=11 // pred_check_branch
        %169 = sbr.rel (%p167) target = $region20
      $region19: #{discriminator_forward.3} parent=11 // pred_region
        _
      $region20: #{discriminator_forward.3} parent=11 // pred_fallthru
        _
      // Predicated region
      $region21: #{discriminator_forward.3} parent=11 // pred_check
        %p170 = pneg %p102
      $region22: #{discriminator_forward.3} parent=11 // pred_check_branch
        %172 = sbr.rel (%p170) target = $region24
      $region23: #{discriminator_forward.3} parent=11 // pred_region
        _
      $region24: #{discriminator_forward.3} parent=11 // pred_fallthru
        _
      // Predicated region
      $region25: #{discriminator_forward.3} parent=11 // pred_check
        %p173 = pneg %p123
      $region26: #{discriminator_forward.3} parent=11 // pred_check_branch
        %175 = sbr.rel (%p173) target = $region28
      $region27: #{discriminator_forward.3} parent=11 // pred_region
        _
      $region28: #{discriminator_forward.3} parent=11 // pred_fallthru
        _
    $region12: #{discriminator_forward.3} parent=5 // pred_fallthru
      _
    %p176 = scmp.lt.s32.totalorder %s13, 2
    // Predicated region
    $region29: #{discriminator_forward.3} parent=5 // pred_check
      %p177 = pneg %p176
    $region30: #{discriminator_forward.3} parent=5 // pred_check_branch
      %179 = sbr.rel (%p177) target = $region32
    $region31: #{discriminator_forward.3} parent=5 // pred_region
      // Predicated region
      $region33: #{discriminator_forward.3} parent=31 // pred_check
        %p180 = pneg %p33
      $region34: #{discriminator_forward.3} parent=31 // pred_check_branch
        %182 = sbr.rel (%p180) target = $region36
      $region35: #{discriminator_forward.3} parent=31 // pred_region
        %p183 = scmp.lt.s32.totalorder %s13, 1
        %s184 = scalar_select %p183, %s13, 1
        %s185 = smul.addr %s184, 10
        %s186 = smul.addr %s185, 4
        %s187 = scalar_lea.vmem %s0, %s186
      $region36: #{discriminator_forward.3} parent=31 // pred_fallthru
        _
    $region32: #{discriminator_forward.3} parent=5 // pred_fallthru
      _
    %p188 = scmp.le.s32.totalorder 1, %s13
    %p189 = scmp.lt.s32.totalorder %s13, 3
    %p190 = pnand %p188, %p189
    %p191 = pneg %p190
    // Predicated region
    $region37: #{discriminator_forward.3} parent=5 // pred_check
      _
    $region38: #{discriminator_forward.3} parent=5 // pred_check_branch
      %193 = sbr.rel (%p190) target = $region40
    $region39: #{discriminator_forward.3} parent=5 // pred_region
      %s194 = ssub.s32 %s13, 1
      %p195 = scmp.lt.s32.totalorder %s18, 1
      %s196 = scalar_select %p195, %s18, 1
      %s197 = smul.addr %s196, 10
      %s198 = smul.addr %s197, 4
      %s199 = scalar_lea.vmem %s0, %s198
      %p200 = pneg %p39
      %p201 = pneg %p36
      %p202 = pneg %p60
      %p203 = pneg %p57
      %p204 = pneg %p81
      %p205 = pneg %p78
      %p206 = pneg %p102
      %p207 = pneg %p99
      %p208 = pneg %p123
      %p209 = pneg %p120
      %p210 = pneg %p149
      %p211 = pneg %p146
      %p212 = scmp.lt.s32.totalorder %s18, 1
      %s213 = scalar_select %p212, %s18, 1
      %s214 = scalar_lea.vmem %s5, %s213
      %p215 = scmp.lt.s32.totalorder %s18, 1
      %s216 = scalar_select %p215, %s18, 1
      %s217 = smul.addr %s216, 10
      %s218 = smul.addr %s217, 4
      %s219 = scalar_lea.vmem %s0, %s218
      %p220 = scmp.lt.s32.totalorder %s18, 1
      %s221 = scalar_select %p220, %s18, 1
      %s222 = scalar_lea.vmem %s5, %s221
      loop: start=0, step=1, limit=4
      $region41: #{discriminator_forward.3} parent=39 // loop_pre_header
        _
      $region42: #{discriminator_forward.3} parent=39 // loop_header
        %s225 = sphi 0, %s229
        %p226 = scmp.ge.s32.totalorder %s225, 4
        %v230 = vphi 0.0, %v1155
      $region43: #{discriminator_forward.3} parent=39 // loop_header_branch
        %228 = sbr.rel (%p226) target = $region47
      $region44: #{discriminator_forward.3} parent=39 // loop_body
        %s231 = smul.u32 %s225, 2
        %s232 = smul.addr %s231, 4
        %s233 = scalar_lea.vmem %s219, %s232
        %v234 = vld [vmem:[%s233] sm:$0x7]
        %v235 = vld [vmem:[%s1] sm:$0xf]
        %v236 = vld [vmem:[%s1 + $0x4] sm:$0xf]
        %v237 = vld [vmem:[%s1 + $0x8] sm:$0xf]
        %v238 = vld [vmem:[%s1 + $0xc] sm:$0xf]
        %v239 = vld [vmem:[%s1 + $0x10] sm:$0xf]
        %v240 = vld [vmem:[%s1 + $0x14] sm:$0xf]
        %v241 = vld [vmem:[%s1 + $0x18] sm:$0xf]
        %v242 = vld [vmem:[%s1 + $0x1c] sm:$0xf]
        %v243 = vld [vmem:[%s1 + $0x20] sm:$0xf]
        %v244 = vld [vmem:[%s1 + $0x24] sm:$0xf]
        %v245 = vld [vmem:[%s1 + $0x28] sm:$0xf]
        %v246 = vld [vmem:[%s1 + $0x2c] sm:$0xf]
        %v247 = vld [vmem:[%s1 + $0x30] sm:$0xf]
        %v248 = vld [vmem:[%s1 + $0x34] sm:$0xf]
        %v249 = vld [vmem:[%s1 + $0x38] sm:$0xf]
        %v250 = vld [vmem:[%s1 + $0x3c] sm:$0xf]
        %s251 = scalar_lea.vmem %s1, 64
        %v252 = vld [vmem:[%s251] sm:$0xf]
        %v253 = vld [vmem:[%s251 + $0x4] sm:$0xf]
        %v254 = vld [vmem:[%s251 + $0x8] sm:$0xf]
        %v255 = vld [vmem:[%s251 + $0xc] sm:$0xf]
        %v256 = vld [vmem:[%s251 + $0x10] sm:$0xf]
        %v257 = vld [vmem:[%s251 + $0x14] sm:$0xf]
        %v258 = vld [vmem:[%s251 + $0x18] sm:$0xf]
        %v259 = vld [vmem:[%s251 + $0x1c] sm:$0xf]
        %v260 = vld [vmem:[%s251 + $0x20] sm:$0xf]
        %v261 = vld [vmem:[%s251 + $0x24] sm:$0xf]
        %v262 = vld [vmem:[%s251 + $0x28] sm:$0xf]
        %v263 = vld [vmem:[%s251 + $0x2c] sm:$0xf]
        %v264 = vld [vmem:[%s251 + $0x30] sm:$0xf]
        %v265 = vld [vmem:[%s251 + $0x34] sm:$0xf]
        %v266 = vld [vmem:[%s251 + $0x38] sm:$0xf]
        %v267 = vld [vmem:[%s251 + $0x3c] sm:$0xf]
        %v269 = vunpack.c.l.b16 %v234
        %v270 = vpack.c.b16 %v269, %v269
        %v272 = vshrl.u32 %v270, 16
        %v274 = vshll.u32 %v270, 16
        %v276 = vrot.slane %v274, 1
        %v277 = vor.u32 %v272, %v276
        %v295 = vunpack.c.l.b16 %v252
        %v296 = vunpack.c.l.b16 %v253
        %v297 = vunpack.c.l.b16 %v254
        %v298 = vunpack.c.l.b16 %v255
        %v299 = vunpack.c.l.b16 %v256
        %v300 = vunpack.c.l.b16 %v257
        %v301 = vunpack.c.l.b16 %v258
        %v302 = vunpack.c.l.b16 %v259
        %v303 = vunpack.c.l.b16 %v260
        %v304 = vunpack.c.l.b16 %v261
        %v305 = vunpack.c.l.b16 %v262
        %v306 = vunpack.c.l.b16 %v263
        %v307 = vunpack.c.l.b16 %v264
        %v308 = vunpack.c.l.b16 %v265
        %v309 = vunpack.c.l.b16 %v266
        %v310 = vunpack.c.l.b16 %v267
        %v311 = vpack.c.b16 %v296, %v295
        %v312 = vpack.c.b16 %v298, %v297
        %v313 = vpack.c.b16 %v300, %v299
        %v314 = vpack.c.b16 %v302, %v301
        %v315 = vpack.c.b16 %v304, %v303
        %v316 = vpack.c.b16 %v306, %v305
        %v317 = vpack.c.b16 %v308, %v307
        %v318 = vpack.c.b16 %v310, %v309
        %327 = vmatprep.subr.bf16.mxu0 0
        %328 = vmatpush1.bf16.msra.mxu0 %v311
        %329 = vmatprep.subr.bf16.mxu0 0
        %330 = vmatpush1.bf16.msra.mxu0 %v312
        %331 = vmatprep.subr.bf16.mxu0 0
        %332 = vmatpush1.bf16.msra.mxu0 %v313
        %333 = vmatprep.subr.bf16.mxu0 0
        %334 = vmatpush1.bf16.msra.mxu0 %v314
        %335 = vmatprep.subr.bf16.mxu0 0
        %336 = vmatpush1.bf16.msra.mxu0 %v315
        %337 = vmatprep.subr.bf16.mxu0 0
        %338 = vmatpush1.bf16.msra.mxu0 %v316
        %339 = vmatprep.subr.bf16.mxu0 0
        %340 = vmatpush1.bf16.msra.mxu0 %v317
        %341 = vmatprep.subr.bf16.mxu0 0
        %342 = vmatpush1.bf16.msra.mxu0 %v318
        %343 = vmatprep.subr.bf16.mxu0 0
        %344 = vmatpush1.bf16.msra.mxu0 0
        %345 = vmatprep.subr.bf16.mxu0 0
        %346 = vmatpush1.bf16.msra.mxu0 0
        %347 = vmatprep.subr.bf16.mxu0 0
        %348 = vmatpush1.bf16.msra.mxu0 0
        %349 = vmatprep.subr.bf16.mxu0 0
        %350 = vmatpush1.bf16.msra.mxu0 0
        %351 = vmatprep.subr.bf16.mxu0 0
        %352 = vmatpush1.bf16.msra.mxu0 0
        %353 = vmatprep.subr.bf16.mxu0 0
        %354 = vmatpush1.bf16.msra.mxu0 0
        %355 = vmatprep.subr.bf16.mxu0 0
        %356 = vmatpush1.bf16.msra.mxu0 0
        %357 = vmatprep.subr.bf16.mxu0 0
        %358 = vmatpush1.bf16.msra.mxu0 0
        %359 = vmatprep.mubr.bf16.mxu0 0
        %360 = vmatmul.mubr.bf16.gmra.mrb[0].mxu0 %v277
        %v361 = vpop.f32.mrb[0].mxu0
        %v362 = vadd.f32 0.0, %v361
        %v363 = vpop.f32.mrb[0].mxu0
        %v364 = vpop.f32.mrb[0].mxu0
        %v365 = vpop.f32.mrb[0].mxu0
        %366 = vdwg.mxu0
        %v383 = vunpack.c.l.b16 %v235
        %v384 = vunpack.c.l.b16 %v236
        %v385 = vunpack.c.l.b16 %v237
        %v386 = vunpack.c.l.b16 %v238
        %v387 = vunpack.c.l.b16 %v239
        %v388 = vunpack.c.l.b16 %v240
        %v389 = vunpack.c.l.b16 %v241
        %v390 = vunpack.c.l.b16 %v242
        %v391 = vunpack.c.l.b16 %v243
        %v392 = vunpack.c.l.b16 %v244
        %v393 = vunpack.c.l.b16 %v245
        %v394 = vunpack.c.l.b16 %v246
        %v395 = vunpack.c.l.b16 %v247
        %v396 = vunpack.c.l.b16 %v248
        %v397 = vunpack.c.l.b16 %v249
        %v398 = vunpack.c.l.b16 %v250
        %v399 = vpack.c.b16 %v384, %v383
        %v400 = vpack.c.b16 %v386, %v385
        %v401 = vpack.c.b16 %v388, %v387
        %v402 = vpack.c.b16 %v390, %v389
        %v403 = vpack.c.b16 %v392, %v391
        %v404 = vpack.c.b16 %v394, %v393
        %v405 = vpack.c.b16 %v396, %v395
        %v406 = vpack.c.b16 %v398, %v397
        %415 = vmatprep.subr.bf16.mxu0 0
        %416 = vmatpush1.bf16.msra.mxu0 %v399
        %417 = vmatprep.subr.bf16.mxu0 0
        %418 = vmatpush1.bf16.msra.mxu0 %v400
        %419 = vmatprep.subr.bf16.mxu0 0
        %420 = vmatpush1.bf16.msra.mxu0 %v401
        %421 = vmatprep.subr.bf16.mxu0 0
        %422 = vmatpush1.bf16.msra.mxu0 %v402
        %423 = vmatprep.subr.bf16.mxu0 0
        %424 = vmatpush1.bf16.msra.mxu0 %v403
        %425 = vmatprep.subr.bf16.mxu0 0
        %426 = vmatpush1.bf16.msra.mxu0 %v404
        %427 = vmatprep.subr.bf16.mxu0 0
        %428 = vmatpush1.bf16.msra.mxu0 %v405
        %429 = vmatprep.subr.bf16.mxu0 0
        %430 = vmatpush1.bf16.msra.mxu0 %v406
        %431 = vmatprep.subr.bf16.mxu0 0
        %432 = vmatpush1.bf16.msra.mxu0 0
        %433 = vmatprep.subr.bf16.mxu0 0
        %434 = vmatpush1.bf16.msra.mxu0 0
        %435 = vmatprep.subr.bf16.mxu0 0
        %436 = vmatpush1.bf16.msra.mxu0 0
        %437 = vmatprep.subr.bf16.mxu0 0
        %438 = vmatpush1.bf16.msra.mxu0 0
        %439 = vmatprep.subr.bf16.mxu0 0
        %440 = vmatpush1.bf16.msra.mxu0 0
        %441 = vmatprep.subr.bf16.mxu0 0
        %442 = vmatpush1.bf16.msra.mxu0 0
        %443 = vmatprep.subr.bf16.mxu0 0
        %444 = vmatpush1.bf16.msra.mxu0 0
        %445 = vmatprep.subr.bf16.mxu0 0
        %446 = vmatpush1.bf16.msra.mxu0 0
        %447 = vmatprep.mubr.bf16.mxu0 0
        %448 = vmatmul.mubr.bf16.gmra.mrb[0].mxu0 %v234
        %v449 = vpop.f32.mrb[0].mxu0
        %v450 = vadd.f32 %v362, %v449
        %v451 = vpop.f32.mrb[0].mxu0
        %v452 = vpop.f32.mrb[0].mxu0
        %v453 = vpop.f32.mrb[0].mxu0
        %454 = vdwg.mxu0
        %s455 = sadd.s32 %s231, 1
        %s456 = smul.addr %s455, 4
        %s457 = scalar_lea.vmem %s219, %s456
        %v458 = vld [vmem:[%s457] sm:$0x7]
        %s459 = scalar_lea.vmem %s1, 128
        %v460 = vld [vmem:[%s459] sm:$0xf]
        %v461 = vld [vmem:[%s459 + $0x4] sm:$0xf]
        %v462 = vld [vmem:[%s459 + $0x8] sm:$0xf]
        %v463 = vld [vmem:[%s459 + $0xc] sm:$0xf]
        %v464 = vld [vmem:[%s459 + $0x10] sm:$0xf]
        %v465 = vld [vmem:[%s459 + $0x14] sm:$0xf]
        %v466 = vld [vmem:[%s459 + $0x18] sm:$0xf]
        %v467 = vld [vmem:[%s459 + $0x1c] sm:$0xf]
        %v468 = vld [vmem:[%s459 + $0x20] sm:$0xf]
        %v469 = vld [vmem:[%s459 + $0x24] sm:$0xf]
        %v470 = vld [vmem:[%s459 + $0x28] sm:$0xf]
        %v471 = vld [vmem:[%s459 + $0x2c] sm:$0xf]
        %v472 = vld [vmem:[%s459 + $0x30] sm:$0xf]
        %v473 = vld [vmem:[%s459 + $0x34] sm:$0xf]
        %v474 = vld [vmem:[%s459 + $0x38] sm:$0xf]
        %v475 = vld [vmem:[%s459 + $0x3c] sm:$0xf]
        %v492 = vunpack.c.l.b16 %v460
        %v493 = vunpack.c.l.b16 %v461
        %v494 = vunpack.c.l.b16 %v462
        %v495 = vunpack.c.l.b16 %v463
        %v496 = vunpack.c.l.b16 %v464
        %v497 = vunpack.c.l.b16 %v465
        %v498 = vunpack.c.l.b16 %v466
        %v499 = vunpack.c.l.b16 %v467
        %v500 = vunpack.c.l.b16 %v468
        %v501 = vunpack.c.l.b16 %v469
        %v502 = vunpack.c.l.b16 %v470
        %v503 = vunpack.c.l.b16 %v471
        %v504 = vunpack.c.l.b16 %v472
        %v505 = vunpack.c.l.b16 %v473
        %v506 = vunpack.c.l.b16 %v474
        %v507 = vunpack.c.l.b16 %v475
        %v508 = vpack.c.b16 %v493, %v492
        %v509 = vpack.c.b16 %v495, %v494
        %v510 = vpack.c.b16 %v497, %v496
        %v511 = vpack.c.b16 %v499, %v498
        %v512 = vpack.c.b16 %v501, %v500
        %v513 = vpack.c.b16 %v503, %v502
        %v514 = vpack.c.b16 %v505, %v504
        %v515 = vpack.c.b16 %v507, %v506
        %524 = vmatprep.subr.bf16.mxu0 0
        %525 = vmatpush1.bf16.msra.mxu0 %v508
        %526 = vmatprep.subr.bf16.mxu0 0
        %527 = vmatpush1.bf16.msra.mxu0 %v509
        %528 = vmatprep.subr.bf16.mxu0 0
        %529 = vmatpush1.bf16.msra.mxu0 %v510
        %530 = vmatprep.subr.bf16.mxu0 0
        %531 = vmatpush1.bf16.msra.mxu0 %v511
        %532 = vmatprep.subr.bf16.mxu0 0
        %533 = vmatpush1.bf16.msra.mxu0 %v512
        %534 = vmatprep.subr.bf16.mxu0 0
        %535 = vmatpush1.bf16.msra.mxu0 %v513
        %536 = vmatprep.subr.bf16.mxu0 0
        %537 = vmatpush1.bf16.msra.mxu0 %v514
        %538 = vmatprep.subr.bf16.mxu0 0
        %539 = vmatpush1.bf16.msra.mxu0 %v515
        %540 = vmatprep.subr.bf16.mxu0 0
        %541 = vmatpush1.bf16.msra.mxu0 0
        %542 = vmatprep.subr.bf16.mxu0 0
        %543 = vmatpush1.bf16.msra.mxu0 0
        %544 = vmatprep.subr.bf16.mxu0 0
        %545 = vmatpush1.bf16.msra.mxu0 0
        %546 = vmatprep.subr.bf16.mxu0 0
        %547 = vmatpush1.bf16.msra.mxu0 0
        %548 = vmatprep.subr.bf16.mxu0 0
        %549 = vmatpush1.bf16.msra.mxu0 0
        %550 = vmatprep.subr.bf16.mxu0 0
        %551 = vmatpush1.bf16.msra.mxu0 0
        %552 = vmatprep.subr.bf16.mxu0 0
        %553 = vmatpush1.bf16.msra.mxu0 0
        %554 = vmatprep.subr.bf16.mxu0 0
        %555 = vmatpush1.bf16.msra.mxu0 0
        %556 = vmatprep.mubr.bf16.mxu0 0
        %557 = vmatmul.mubr.bf16.gmra.mrb[0].mxu0 %v458
        %v558 = vpop.f32.mrb[0].mxu0
        %v559 = vadd.f32 0.0, %v558
        %v560 = vpop.f32.mrb[0].mxu0
        %v561 = vpop.f32.mrb[0].mxu0
        %v562 = vpop.f32.mrb[0].mxu0
        %563 = vdwg.mxu0
        %v564 = vadd.f32 %v450, %v559
        %s565 = scalar_lea.vmem %s1, 192
        %v566 = vld [vmem:[%s565] sm:$0xf]
        %v567 = vld [vmem:[%s565 + $0x4] sm:$0xf]
        %v568 = vld [vmem:[%s565 + $0x8] sm:$0xf]
        %v569 = vld [vmem:[%s565 + $0xc] sm:$0xf]
        %v570 = vld [vmem:[%s565 + $0x10] sm:$0xf]
        %v571 = vld [vmem:[%s565 + $0x14] sm:$0xf]
        %v572 = vld [vmem:[%s565 + $0x18] sm:$0xf]
        %v573 = vld [vmem:[%s565 + $0x1c] sm:$0xf]
        %v574 = vld [vmem:[%s565 + $0x20] sm:$0xf]
        %v575 = vld [vmem:[%s565 + $0x24] sm:$0xf]
        %v576 = vld [vmem:[%s565 + $0x28] sm:$0xf]
        %v577 = vld [vmem:[%s565 + $0x2c] sm:$0xf]
        %v578 = vld [vmem:[%s565 + $0x30] sm:$0xf]
        %v579 = vld [vmem:[%s565 + $0x34] sm:$0xf]
        %v580 = vld [vmem:[%s565 + $0x38] sm:$0xf]
        %v581 = vld [vmem:[%s565 + $0x3c] sm:$0xf]
        %v583 = vunpack.c.l.b16 %v458
        %v584 = vpack.c.b16 %v583, %v583
        %v586 = vshrl.u32 %v584, 16
        %v588 = vshll.u32 %v584, 16
        %v590 = vrot.slane %v588, 1
        %v591 = vor.u32 %v586, %v590
        %v609 = vunpack.c.l.b16 %v566
        %v610 = vunpack.c.l.b16 %v567
        %v611 = vunpack.c.l.b16 %v568
        %v612 = vunpack.c.l.b16 %v569
        %v613 = vunpack.c.l.b16 %v570
        %v614 = vunpack.c.l.b16 %v571
        %v615 = vunpack.c.l.b16 %v572
        %v616 = vunpack.c.l.b16 %v573
        %v617 = vunpack.c.l.b16 %v574
        %v618 = vunpack.c.l.b16 %v575
        %v619 = vunpack.c.l.b16 %v576
        %v620 = vunpack.c.l.b16 %v577
        %v621 = vunpack.c.l.b16 %v578
        %v622 = vunpack.c.l.b16 %v579
        %v623 = vunpack.c.l.b16 %v580
        %v624 = vunpack.c.l.b16 %v581
        %v625 = vpack.c.b16 %v610, %v609
        %v626 = vpack.c.b16 %v612, %v611
        %v627 = vpack.c.b16 %v614, %v613
        %v628 = vpack.c.b16 %v616, %v615
        %v629 = vpack.c.b16 %v618, %v617
        %v630 = vpack.c.b16 %v620, %v619
        %v631 = vpack.c.b16 %v622, %v621
        %v632 = vpack.c.b16 %v624, %v623
        %641 = vmatprep.subr.bf16.mxu0 0
        %642 = vmatpush1.bf16.msra.mxu0 %v625
        %643 = vmatprep.subr.bf16.mxu0 0
        %644 = vmatpush1.bf16.msra.mxu0 %v626
        %645 = vmatprep.subr.bf16.mxu0 0
        %646 = vmatpush1.bf16.msra.mxu0 %v627
        %647 = vmatprep.subr.bf16.mxu0 0
        %648 = vmatpush1.bf16.msra.mxu0 %v628
        %649 = vmatprep.subr.bf16.mxu0 0
        %650 = vmatpush1.bf16.msra.mxu0 %v629
        %651 = vmatprep.subr.bf16.mxu0 0
        %652 = vmatpush1.bf16.msra.mxu0 %v630
        %653 = vmatprep.subr.bf16.mxu0 0
        %654 = vmatpush1.bf16.msra.mxu0 %v631
        %655 = vmatprep.subr.bf16.mxu0 0
        %656 = vmatpush1.bf16.msra.mxu0 %v632
        %657 = vmatprep.subr.bf16.mxu0 0
        %658 = vmatpush1.bf16.msra.mxu0 0
        %659 = vmatprep.subr.bf16.mxu0 0
        %660 = vmatpush1.bf16.msra.mxu0 0
        %661 = vmatprep.subr.bf16.mxu0 0
        %662 = vmatpush1.bf16.msra.mxu0 0
        %663 = vmatprep.subr.bf16.mxu0 0
        %664 = vmatpush1.bf16.msra.mxu0 0
        %665 = vmatprep.subr.bf16.mxu0 0
        %666 = vmatpush1.bf16.msra.mxu0 0
        %667 = vmatprep.subr.bf16.mxu0 0
        %668 = vmatpush1.bf16.msra.mxu0 0
        %669 = vmatprep.subr.bf16.mxu0 0
        %670 = vmatpush1.bf16.msra.mxu0 0
        %671 = vmatprep.subr.bf16.mxu0 0
        %672 = vmatpush1.bf16.msra.mxu0 0
        %673 = vmatprep.mubr.bf16.mxu0 0
        %674 = vmatmul.mubr.bf16.gmra.mrb[0].mxu0 %v591
        %v675 = vpop.f32.mrb[0].mxu0
        %v676 = vadd.f32 0.0, %v675
        %v677 = vpop.f32.mrb[0].mxu0
        %v678 = vpop.f32.mrb[0].mxu0
        %v679 = vpop.f32.mrb[0].mxu0
        %680 = vdwg.mxu0
        %v681 = vadd.f32 %v564, %v676
        %s682 = sadd.s32 %s231, 2
        %s683 = smul.addr %s682, 4
        %s684 = scalar_lea.vmem %s219, %s683
        %v685 = vld [vmem:[%s684] sm:$0x7]
        %s686 = scalar_lea.vmem %s1, 256
        %v687 = vld [vmem:[%s686] sm:$0xf]
        %v688 = vld [vmem:[%s686 + $0x4] sm:$0xf]
        %v689 = vld [vmem:[%s686 + $0x8] sm:$0xf]
        %v690 = vld [vmem:[%s686 + $0xc] sm:$0xf]
        %v691 = vld [vmem:[%s686 + $0x10] sm:$0xf]
        %v692 = vld [vmem:[%s686 + $0x14] sm:$0xf]
        %v693 = vld [vmem:[%s686 + $0x18] sm:$0xf]
        %v694 = vld [vmem:[%s686 + $0x1c] sm:$0xf]
        %v695 = vld [vmem:[%s686 + $0x20] sm:$0xf]
        %v696 = vld [vmem:[%s686 + $0x24] sm:$0xf]
        %v697 = vld [vmem:[%s686 + $0x28] sm:$0xf]
        %v698 = vld [vmem:[%s686 + $0x2c] sm:$0xf]
        %v699 = vld [vmem:[%s686 + $0x30] sm:$0xf]
        %v700 = vld [vmem:[%s686 + $0x34] sm:$0xf]
        %v701 = vld [vmem:[%s686 + $0x38] sm:$0xf]
        %v702 = vld [vmem:[%s686 + $0x3c] sm:$0xf]
        %v719 = vunpack.c.l.b16 %v687
        %v720 = vunpack.c.l.b16 %v688
        %v721 = vunpack.c.l.b16 %v689
        %v722 = vunpack.c.l.b16 %v690
        %v723 = vunpack.c.l.b16 %v691
        %v724 = vunpack.c.l.b16 %v692
        %v725 = vunpack.c.l.b16 %v693
        %v726 = vunpack.c.l.b16 %v694
        %v727 = vunpack.c.l.b16 %v695
        %v728 = vunpack.c.l.b16 %v696
        %v729 = vunpack.c.l.b16 %v697
        %v730 = vunpack.c.l.b16 %v698
        %v731 = vunpack.c.l.b16 %v699
        %v732 = vunpack.c.l.b16 %v700
        %v733 = vunpack.c.l.b16 %v701
        %v734 = vunpack.c.l.b16 %v702
        %v735 = vpack.c.b16 %v720, %v719
        %v736 = vpack.c.b16 %v722, %v721
        %v737 = vpack.c.b16 %v724, %v723
        %v738 = vpack.c.b16 %v726, %v725
        %v739 = vpack.c.b16 %v728, %v727
        %v740 = vpack.c.b16 %v730, %v729
        %v741 = vpack.c.b16 %v732, %v731
        %v742 = vpack.c.b16 %v734, %v733
        %751 = vmatprep.subr.bf16.mxu0 0
        %752 = vmatpush1.bf16.msra.mxu0 %v735
        %753 = vmatprep.subr.bf16.mxu0 0
        %754 = vmatpush1.bf16.msra.mxu0 %v736
        %755 = vmatprep.subr.bf16.mxu0 0
        %756 = vmatpush1.bf16.msra.mxu0 %v737
        %757 = vmatprep.subr.bf16.mxu0 0
        %758 = vmatpush1.bf16.msra.mxu0 %v738
        %759 = vmatprep.subr.bf16.mxu0 0
        %760 = vmatpush1.bf16.msra.mxu0 %v739
        %761 = vmatprep.subr.bf16.mxu0 0
        %762 = vmatpush1.bf16.msra.mxu0 %v740
        %763 = vmatprep.subr.bf16.mxu0 0
        %764 = vmatpush1.bf16.msra.mxu0 %v741
        %765 = vmatprep.subr.bf16.mxu0 0
        %766 = vmatpush1.bf16.msra.mxu0 %v742
        %767 = vmatprep.subr.bf16.mxu0 0
        %768 = vmatpush1.bf16.msra.mxu0 0
        %769 = vmatprep.subr.bf16.mxu0 0
        %770 = vmatpush1.bf16.msra.mxu0 0
        %771 = vmatprep.subr.bf16.mxu0 0
        %772 = vmatpush1.bf16.msra.mxu0 0
        %773 = vmatprep.subr.bf16.mxu0 0
        %774 = vmatpush1.bf16.msra.mxu0 0
        %775 = vmatprep.subr.bf16.mxu0 0
        %776 = vmatpush1.bf16.msra.mxu0 0
        %777 = vmatprep.subr.bf16.mxu0 0
        %778 = vmatpush1.bf16.msra.mxu0 0
        %779 = vmatprep.subr.bf16.mxu0 0
        %780 = vmatpush1.bf16.msra.mxu0 0
        %781 = vmatprep.subr.bf16.mxu0 0
        %782 = vmatpush1.bf16.msra.mxu0 0
        %783 = vmatprep.mubr.bf16.mxu0 0
        %784 = vmatmul.mubr.bf16.gmra.mrb[0].mxu0 %v685
        %v785 = vpop.f32.mrb[0].mxu0
        %v786 = vadd.f32 0.0, %v785
        %v787 = vpop.f32.mrb[0].mxu0
        %v788 = vpop.f32.mrb[0].mxu0
        %v789 = vpop.f32.mrb[0].mxu0
        %790 = vdwg.mxu0
        %v791 = vadd.f32 %v681, %v786
        %s792 = scalar_lea.vmem %s1, 320
        %v793 = vld [vmem:[%s792] sm:$0xf]
        %v794 = vld [vmem:[%s792 + $0x4] sm:$0xf]
        %v795 = vld [vmem:[%s792 + $0x8] sm:$0xf]
        %v796 = vld [vmem:[%s792 + $0xc] sm:$0xf]
        %v797 = vld [vmem:[%s792 + $0x10] sm:$0xf]
        %v798 = vld [vmem:[%s792 + $0x14] sm:$0xf]
        %v799 = vld [vmem:[%s792 + $0x18] sm:$0xf]
        %v800 = vld [vmem:[%s792 + $0x1c] sm:$0xf]
        %v801 = vld [vmem:[%s792 + $0x20] sm:$0xf]
        %v802 = vld [vmem:[%s792 + $0x24] sm:$0xf]
        %v803 = vld [vmem:[%s792 + $0x28] sm:$0xf]
        %v804 = vld [vmem:[%s792 + $0x2c] sm:$0xf]
        %v805 = vld [vmem:[%s792 + $0x30] sm:$0xf]
        %v806 = vld [vmem:[%s792 + $0x34] sm:$0xf]
        %v807 = vld [vmem:[%s792 + $0x38] sm:$0xf]
        %v808 = vld [vmem:[%s792 + $0x3c] sm:$0xf]
        %v810 = vunpack.c.l.b16 %v685
        %v811 = vpack.c.b16 %v810, %v810
        %v813 = vshrl.u32 %v811, 16
        %v815 = vshll.u32 %v811, 16
        %v817 = vrot.slane %v815, 1
        %v818 = vor.u32 %v813, %v817
        %v836 = vunpack.c.l.b16 %v793
        %v837 = vunpack.c.l.b16 %v794
        %v838 = vunpack.c.l.b16 %v795
        %v839 = vunpack.c.l.b16 %v796
        %v840 = vunpack.c.l.b16 %v797
        %v841 = vunpack.c.l.b16 %v798
        %v842 = vunpack.c.l.b16 %v799
        %v843 = vunpack.c.l.b16 %v800
        %v844 = vunpack.c.l.b16 %v801
        %v845 = vunpack.c.l.b16 %v802
        %v846 = vunpack.c.l.b16 %v803
        %v847 = vunpack.c.l.b16 %v804
        %v848 = vunpack.c.l.b16 %v805
        %v849 = vunpack.c.l.b16 %v806
        %v850 = vunpack.c.l.b16 %v807
        %v851 = vunpack.c.l.b16 %v808
        %v852 = vpack.c.b16 %v837, %v836
        %v853 = vpack.c.b16 %v839, %v838
        %v854 = vpack.c.b16 %v841, %v840
        %v855 = vpack.c.b16 %v843, %v842
        %v856 = vpack.c.b16 %v845, %v844
        %v857 = vpack.c.b16 %v847, %v846
        %v858 = vpack.c.b16 %v849, %v848
        %v859 = vpack.c.b16 %v851, %v850
        %868 = vmatprep.subr.bf16.mxu0 0
        %869 = vmatpush1.bf16.msra.mxu0 %v852
        %870 = vmatprep.subr.bf16.mxu0 0
        %871 = vmatpush1.bf16.msra.mxu0 %v853
        %872 = vmatprep.subr.bf16.mxu0 0
        %873 = vmatpush1.bf16.msra.mxu0 %v854
        %874 = vmatprep.subr.bf16.mxu0 0
        %875 = vmatpush1.bf16.msra.mxu0 %v855
        %876 = vmatprep.subr.bf16.mxu0 0
        %877 = vmatpush1.bf16.msra.mxu0 %v856
        %878 = vmatprep.subr.bf16.mxu0 0
        %879 = vmatpush1.bf16.msra.mxu0 %v857
        %880 = vmatprep.subr.bf16.mxu0 0
        %881 = vmatpush1.bf16.msra.mxu0 %v858
        %882 = vmatprep.subr.bf16.mxu0 0
        %883 = vmatpush1.bf16.msra.mxu0 %v859
        %884 = vmatprep.subr.bf16.mxu0 0
        %885 = vmatpush1.bf16.msra.mxu0 0
        %886 = vmatprep.subr.bf16.mxu0 0
        %887 = vmatpush1.bf16.msra.mxu0 0
        %888 = vmatprep.subr.bf16.mxu0 0
        %889 = vmatpush1.bf16.msra.mxu0 0
        %890 = vmatprep.subr.bf16.mxu0 0
        %891 = vmatpush1.bf16.msra.mxu0 0
        %892 = vmatprep.subr.bf16.mxu0 0
        %893 = vmatpush1.bf16.msra.mxu0 0
        %894 = vmatprep.subr.bf16.mxu0 0
        %895 = vmatpush1.bf16.msra.mxu0 0
        %896 = vmatprep.subr.bf16.mxu0 0
        %897 = vmatpush1.bf16.msra.mxu0 0
        %898 = vmatprep.subr.bf16.mxu0 0
        %899 = vmatpush1.bf16.msra.mxu0 0
        %900 = vmatprep.mubr.bf16.mxu0 0
        %901 = vmatmul.mubr.bf16.gmra.mrb[0].mxu0 %v818
        %v902 = vpop.f32.mrb[0].mxu0
        %v903 = vadd.f32 0.0, %v902
        %v904 = vpop.f32.mrb[0].mxu0
        %v905 = vpop.f32.mrb[0].mxu0
        %v906 = vpop.f32.mrb[0].mxu0
        %907 = vdwg.mxu0
        %v908 = vadd.f32 %v791, %v903
        %s909 = sadd.s32 %s231, 3
        %s910 = smul.addr %s909, 4
        %s911 = scalar_lea.vmem %s219, %s910
        %v912 = vld [vmem:[%s911] sm:$0x7]
        %s913 = scalar_lea.vmem %s1, 384
        %v914 = vld [vmem:[%s913] sm:$0xf]
        %v915 = vld [vmem:[%s913 + $0x4] sm:$0xf]
        %v916 = vld [vmem:[%s913 + $0x8] sm:$0xf]
        %v917 = vld [vmem:[%s913 + $0xc] sm:$0xf]
        %v918 = vld [vmem:[%s913 + $0x10] sm:$0xf]
        %v919 = vld [vmem:[%s913 + $0x14] sm:$0xf]
        %v920 = vld [vmem:[%s913 + $0x18] sm:$0xf]
        %v921 = vld [vmem:[%s913 + $0x1c] sm:$0xf]
        %v922 = vld [vmem:[%s913 + $0x20] sm:$0xf]
        %v923 = vld [vmem:[%s913 + $0x24] sm:$0xf]
        %v924 = vld [vmem:[%s913 + $0x28] sm:$0xf]
        %v925 = vld [vmem:[%s913 + $0x2c] sm:$0xf]
        %v926 = vld [vmem:[%s913 + $0x30] sm:$0xf]
        %v927 = vld [vmem:[%s913 + $0x34] sm:$0xf]
        %v928 = vld [vmem:[%s913 + $0x38] sm:$0xf]
        %v929 = vld [vmem:[%s913 + $0x3c] sm:$0xf]
        %v946 = vunpack.c.l.b16 %v914
        %v947 = vunpack.c.l.b16 %v915
        %v948 = vunpack.c.l.b16 %v916
        %v949 = vunpack.c.l.b16 %v917
        %v950 = vunpack.c.l.b16 %v918
        %v951 = vunpack.c.l.b16 %v919
        %v952 = vunpack.c.l.b16 %v920
        %v953 = vunpack.c.l.b16 %v921
        %v954 = vunpack.c.l.b16 %v922
        %v955 = vunpack.c.l.b16 %v923
        %v956 = vunpack.c.l.b16 %v924
        %v957 = vunpack.c.l.b16 %v925
        %v958 = vunpack.c.l.b16 %v926
        %v959 = vunpack.c.l.b16 %v927
        %v960 = vunpack.c.l.b16 %v928
        %v961 = vunpack.c.l.b16 %v929
        %v962 = vpack.c.b16 %v947, %v946
        %v963 = vpack.c.b16 %v949, %v948
        %v964 = vpack.c.b16 %v951, %v950
        %v965 = vpack.c.b16 %v953, %v952
        %v966 = vpack.c.b16 %v955, %v954
        %v967 = vpack.c.b16 %v957, %v956
        %v968 = vpack.c.b16 %v959, %v958
        %v969 = vpack.c.b16 %v961, %v960
        %978 = vmatprep.subr.bf16.mxu0 0
        %979 = vmatpush1.bf16.msra.mxu0 %v962
        %980 = vmatprep.subr.bf16.mxu0 0
        %981 = vmatpush1.bf16.msra.mxu0 %v963
        %982 = vmatprep.subr.bf16.mxu0 0
        %983 = vmatpush1.bf16.msra.mxu0 %v964
        %984 = vmatprep.subr.bf16.mxu0 0
        %985 = vmatpush1.bf16.msra.mxu0 %v965
        %986 = vmatprep.subr.bf16.mxu0 0
        %987 = vmatpush1.bf16.msra.mxu0 %v966
        %988 = vmatprep.subr.bf16.mxu0 0
        %989 = vmatpush1.bf16.msra.mxu0 %v967
        %990 = vmatprep.subr.bf16.mxu0 0
        %991 = vmatpush1.bf16.msra.mxu0 %v968
        %992 = vmatprep.subr.bf16.mxu0 0
        %993 = vmatpush1.bf16.msra.mxu0 %v969
        %994 = vmatprep.subr.bf16.mxu0 0
        %995 = vmatpush1.bf16.msra.mxu0 0
        %996 = vmatprep.subr.bf16.mxu0 0
        %997 = vmatpush1.bf16.msra.mxu0 0
        %998 = vmatprep.subr.bf16.mxu0 0
        %999 = vmatpush1.bf16.msra.mxu0 0
        %1000 = vmatprep.subr.bf16.mxu0 0
        %1001 = vmatpush1.bf16.msra.mxu0 0
        %1002 = vmatprep.subr.bf16.mxu0 0
        %1003 = vmatpush1.bf16.msra.mxu0 0
        %1004 = vmatprep.subr.bf16.mxu0 0
        %1005 = vmatpush1.bf16.msra.mxu0 0
        %1006 = vmatprep.subr.bf16.mxu0 0
        %1007 = vmatpush1.bf16.msra.mxu0 0
        %1008 = vmatprep.subr.bf16.mxu0 0
        %1009 = vmatpush1.bf16.msra.mxu0 0
        %1010 = vmatprep.mubr.bf16.mxu0 0
        %1011 = vmatmul.mubr.bf16.gmra.mrb[0].mxu0 %v912
        %v1012 = vpop.f32.mrb[0].mxu0
        %v1013 = vadd.f32 0.0, %v1012
        %v1014 = vpop.f32.mrb[0].mxu0
        %v1015 = vpop.f32.mrb[0].mxu0
        %v1016 = vpop.f32.mrb[0].mxu0
        %1017 = vdwg.mxu0
        %v1018 = vadd.f32 %v908, %v1013
        %s1019 = scalar_lea.vmem %s1, 448
        %v1020 = vld [vmem:[%s1019] sm:$0xf]
        %v1021 = vld [vmem:[%s1019 + $0x4] sm:$0xf]
        %v1022 = vld [vmem:[%s1019 + $0x8] sm:$0xf]
        %v1023 = vld [vmem:[%s1019 + $0xc] sm:$0xf]
        %v1024 = vld [vmem:[%s1019 + $0x10] sm:$0xf]
        %v1025 = vld [vmem:[%s1019 + $0x14] sm:$0xf]
        %v1026 = vld [vmem:[%s1019 + $0x18] sm:$0xf]
        %v1027 = vld [vmem:[%s1019 + $0x1c] sm:$0xf]
        %v1028 = vld [vmem:[%s1019 + $0x20] sm:$0xf]
        %v1029 = vld [vmem:[%s1019 + $0x24] sm:$0xf]
        %v1030 = vld [vmem:[%s1019 + $0x28] sm:$0xf]
        %v1031 = vld [vmem:[%s1019 + $0x2c] sm:$0xf]
        %v1032 = vld [vmem:[%s1019 + $0x30] sm:$0xf]
        %v1033 = vld [vmem:[%s1019 + $0x34] sm:$0xf]
        %v1034 = vld [vmem:[%s1019 + $0x38] sm:$0xf]
        %v1035 = vld [vmem:[%s1019 + $0x3c] sm:$0xf]
        %v1037 = vunpack.c.l.b16 %v912
        %v1038 = vpack.c.b16 %v1037, %v1037
        %v1040 = vshrl.u32 %v1038, 16
        %v1042 = vshll.u32 %v1038, 16
        %v1044 = vrot.slane %v1042, 1
        %v1045 = vor.u32 %v1040, %v1044
        %v1063 = vunpack.c.l.b16 %v1020
        %v1064 = vunpack.c.l.b16 %v1021
        %v1065 = vunpack.c.l.b16 %v1022
        %v1066 = vunpack.c.l.b16 %v1023
        %v1067 = vunpack.c.l.b16 %v1024
        %v1068 = vunpack.c.l.b16 %v1025
        %v1069 = vunpack.c.l.b16 %v1026
        %v1070 = vunpack.c.l.b16 %v1027
        %v1071 = vunpack.c.l.b16 %v1028
        %v1072 = vunpack.c.l.b16 %v1029
        %v1073 = vunpack.c.l.b16 %v1030
        %v1074 = vunpack.c.l.b16 %v1031
        %v1075 = vunpack.c.l.b16 %v1032
        %v1076 = vunpack.c.l.b16 %v1033
        %v1077 = vunpack.c.l.b16 %v1034
        %v1078 = vunpack.c.l.b16 %v1035
        %v1079 = vpack.c.b16 %v1064, %v1063
        %v1080 = vpack.c.b16 %v1066, %v1065
        %v1081 = vpack.c.b16 %v1068, %v1067
        %v1082 = vpack.c.b16 %v1070, %v1069
        %v1083 = vpack.c.b16 %v1072, %v1071
        %v1084 = vpack.c.b16 %v1074, %v1073
        %v1085 = vpack.c.b16 %v1076, %v1075
        %v1086 = vpack.c.b16 %v1078, %v1077
        %1095 = vmatprep.subr.bf16.mxu0 0
        %1096 = vmatpush1.bf16.msra.mxu0 %v1079
        %1097 = vmatprep.subr.bf16.mxu0 0
        %1098 = vmatpush1.bf16.msra.mxu0 %v1080
        %1099 = vmatprep.subr.bf16.mxu0 0
        %1100 = vmatpush1.bf16.msra.mxu0 %v1081
        %1101 = vmatprep.subr.bf16.mxu0 0
        %1102 = vmatpush1.bf16.msra.mxu0 %v1082
        %1103 = vmatprep.subr.bf16.mxu0 0
        %1104 = vmatpush1.bf16.msra.mxu0 %v1083
        %1105 = vmatprep.subr.bf16.mxu0 0
        %1106 = vmatpush1.bf16.msra.mxu0 %v1084
        %1107 = vmatprep.subr.bf16.mxu0 0
        %1108 = vmatpush1.bf16.msra.mxu0 %v1085
        %1109 = vmatprep.subr.bf16.mxu0 0
        %1110 = vmatpush1.bf16.msra.mxu0 %v1086
        %1111 = vmatprep.subr.bf16.mxu0 0
        %1112 = vmatpush1.bf16.msra.mxu0 0
        %1113 = vmatprep.subr.bf16.mxu0 0
        %1114 = vmatpush1.bf16.msra.mxu0 0
        %1115 = vmatprep.subr.bf16.mxu0 0
        %1116 = vmatpush1.bf16.msra.mxu0 0
        %1117 = vmatprep.subr.bf16.mxu0 0
        %1118 = vmatpush1.bf16.msra.mxu0 0
        %1119 = vmatprep.subr.bf16.mxu0 0
        %1120 = vmatpush1.bf16.msra.mxu0 0
        %1121 = vmatprep.subr.bf16.mxu0 0
        %1122 = vmatpush1.bf16.msra.mxu0 0
        %1123 = vmatprep.subr.bf16.mxu0 0
        %1124 = vmatpush1.bf16.msra.mxu0 0
        %1125 = vmatprep.subr.bf16.mxu0 0
        %1126 = vmatpush1.bf16.msra.mxu0 0
        %1127 = vmatprep.mubr.bf16.mxu0 0
        %1128 = vmatmul.mubr.bf16.gmra.mrb[0].mxu0 %v1045
        %v1129 = vpop.f32.mrb[0].mxu0
        %v1130 = vadd.f32 0.0, %v1129
        %v1131 = vpop.f32.mrb[0].mxu0
        %v1132 = vpop.f32.mrb[0].mxu0
        %v1133 = vpop.f32.mrb[0].mxu0
        %1134 = vdwg.mxu0
        %v1135 = vadd.f32 %v1018, %v1130
        %v1136 = vld [vmem:[%s2] sm:$0x1]
        %v1138 = vlaneseq
        %v1139 = vshrl.u32 %v1138, 7
        %v1140 = vsub.s32 0, %v1139
        %v1141 = vrot.slane %v1136, %v1140
        %v1143 = vadd.f32 %v1135, %v1141
        %s1144 = smul.u32 %s225, 4
        %s1145 = scalar_lea.vmem [#allocation2], %s1144
        %1146 = vst [vmem:[%s1145] sm:$0xf] %v1143
        %vm1147 = vcmask 1043456
        %v1148 = vsel %vm1147, %v1143, 0.0
        %v1149 = vrot.slane %v1148, 4
        %v1150 = vadd.f32 %v1148, %v1149
        %v1151 = vrot.slane %v1150, 2
        %v1152 = vadd.f32 %v1150, %v1151
        %v1153 = vrot.slane %v1152, 1
        %v1154 = vadd.f32 %v1152, %v1153
        %v1155 = vadd.f32 %v230, %v1154
      $region45: #{discriminator_forward.3} parent=39 // loop_footer
        %s229 = sadd.s32 1, %s225
      $region46: #{discriminator_forward.3} parent=39 // loop_footer_branch
        %224 = sbr.rel target = $region42
      $region47: #{discriminator_forward.3} parent=39 // loop_exit
        _
      %v1156 = vmul.f32 %v230, 0.0625
      loop: start=0, step=1, limit=4
      $region48: #{discriminator_forward.3} parent=39 // loop_pre_header
        _
      $region49: #{discriminator_forward.3} parent=39 // loop_header
        %s1158 = sphi 0, %s1162
        %p1159 = scmp.ge.s32.totalorder %s1158, 4
        %v1163 = vphi 0.0, %v1177
      $region50: #{discriminator_forward.3} parent=39 // loop_header_branch
        %1161 = sbr.rel (%p1159) target = $region54
      $region51: #{discriminator_forward.3} parent=39 // loop_body
        %s1164 = smul.u32 %s1158, 4
        %s1165 = scalar_lea.vmem [#allocation2], %s1164
        %v1166 = vld [vmem:[%s1165] sm:$0xf]
        %v1167 = vsub.f32 %v1166, %v1156
        %v1168 = vmul.f32 %v1167, %v1167
        %vm1169 = vcmask 1043456
        %v1170 = vsel %vm1169, %v1168, 0.0
        %v1171 = vrot.slane %v1170, 4
        %v1172 = vadd.f32 %v1170, %v1171
        %v1173 = vrot.slane %v1172, 2
        %v1174 = vadd.f32 %v1172, %v1173
        %v1175 = vrot.slane %v1174, 1
        %v1176 = vadd.f32 %v1174, %v1175
        %v1177 = vadd.f32 %v1163, %v1176
      $region52: #{discriminator_forward.3} parent=39 // loop_footer
        %s1162 = sadd.s32 1, %s1158
      $region53: #{discriminator_forward.3} parent=39 // loop_footer_branch
        %1157 = sbr.rel target = $region49
      $region54: #{discriminator_forward.3} parent=39 // loop_exit
        _
      %v1178 = vmul.f32 %v1163, 0.0625
      %v1179 = vadd.f32 %v1178, 1e-05
      %v1180 = vrsqrt.pop %v1179
      loop: start=0, step=1, limit=4
      $region55: #{discriminator_forward.3} parent=39 // loop_pre_header
        _
      $region56: #{discriminator_forward.3} parent=39 // loop_header
        %s1182 = sphi 0, %s1186
        %p1183 = scmp.ge.s32.totalorder %s1182, 4
        %v1187 = vphi 0.0, %v1206
      $region57: #{discriminator_forward.3} parent=39 // loop_header_branch
        %1185 = sbr.rel (%p1183) target = $region61
      $region58: #{discriminator_forward.3} parent=39 // loop_body
        %s1188 = smul.u32 %s1182, 4
        %s1189 = scalar_lea.vmem [#allocation2], %s1188
        %v1190 = vld [vmem:[%s1189] sm:$0xf]
        %v1191 = vsub.f32 %v1190, %v1156
        %v1192 = vmul.f32 %v1191, %v1180
        %v1193 = vmul.f32 %v1192, 0.2
        %v1194 = vmax.f32 %v1192, %v1193
        %s1195 = scalar_lea.vmem %s3, %s1188
        %v1196 = vld [vmem:[%s1195] sm:$0xf]
        %v1197 = vmul.f32 %v1194, %v1196
        %vm1198 = vcmask 1043456
        %v1199 = vsel %vm1198, %v1197, 0.0
        %v1200 = vrot.slane %v1199, 4
        %v1201 = vadd.f32 %v1199, %v1200
        %v1202 = vrot.slane %v1201, 2
        %v1203 = vadd.f32 %v1201, %v1202
        %v1204 = vrot.slane %v1203, 1
        %v1205 = vadd.f32 %v1203, %v1204
        %v1206 = vadd.f32 %v1187, %v1205
      $region59: #{discriminator_forward.3} parent=39 // loop_footer
        %s1186 = sadd.s32 1, %s1182
      $region60: #{discriminator_forward.3} parent=39 // loop_footer_branch
        %1181 = sbr.rel target = $region56
      $region61: #{discriminator_forward.3} parent=39 // loop_exit
        _
      %1207 = vadd.xlane.f32.xlu0 %v1187
      %v1208 = vpop.xlane.xlu0 %1207
      %v1209 = vld [vmem:[#allocation3] sm:$0x1]
      %v1210 = vadd.f32 %v1208, %v1209
      %v1211 = vxor.u32 %v1210, 2147483648
      %v1212 = vmul.f32 %v1211, 1.442695
      %v1213 = vpow.pop %v1212
      %v1214 = vadd.f32 %v1213, 1.0
      %v1215 = vrcp.pop %v1214
      %v1216 = vmul.f32 1.0, %v1215
      %vm1217 = vcmask 0
      %1218 = vst.msk [vmem:[%s222] sm:$0x1] %vm1217, %v1216
      %p1219 = scmp.lt.s32.totalorder %s18, 1
      %s1220 = scalar_select %p1219, %s18, 1
      %s1221 = scalar_lea.vmem %s5, %s1220
      // Predicated region
      $region62: #{discriminator_forward.3} parent=39 // pred_check
        %p1222 = pneg %p146
      $region63: #{discriminator_forward.3} parent=39 // pred_check_branch
        %1224 = sbr.rel (%p1222) target = $region65
      $region64: #{discriminator_forward.3} parent=39 // pred_region
        _
      $region65: #{discriminator_forward.3} parent=39 // pred_fallthru
        _
    $region40: #{discriminator_forward.3} parent=5 // pred_fallthru
      _
    %p1225 = scmp.le.s32.totalorder 2, %s13
    // Predicated region
    $region66: #{discriminator_forward.3} parent=5 // pred_check
      %p1226 = pneg %p1225
    $region67: #{discriminator_forward.3} parent=5 // pred_check_branch
      %1228 = sbr.rel (%p1226) target = $region69
    $region68: #{discriminator_forward.3} parent=5 // pred_region
      %s1229 = ssub.s32 %s13, 2
      // Predicated region
      $region70: #{discriminator_forward.3} parent=68 // pred_check
        %p1230 = pneg %p152
      $region71: #{discriminator_forward.3} parent=68 // pred_check_branch
        %1232 = sbr.rel (%p1230) target = $region73
      $region72: #{discriminator_forward.3} parent=68 // pred_region
        %p1233 = scmp.lt.s32.totalorder %s19, 1
        %s1234 = scalar_select %p1233, %s19, 1
        %s1235 = scalar_lea.vmem %s5, %s1234
      $region73: #{discriminator_forward.3} parent=68 // pred_fallthru
        _
    $region69: #{discriminator_forward.3} parent=5 // pred_fallthru
      _
  $region6: #{discriminator_forward.3} parent=0 // loop_footer
    %s17 = sadd.s32 1, %s13
  $region7: #{discriminator_forward.3} parent=0 // loop_footer_branch
    %12 = sbr.rel target = $region3
  $region8: #{discriminator_forward.3} parent=0 // loop_exit
    _

</llo_original>
